<compile_context>
chip_gen: v5e
topology: v5e:2x2
jax: 0.10.0
libtpu: 0.0.40
codegen_flags: <defaults>
</compile_context>

<pallas_src>
import functools

import jax
import jax.numpy as jnp
from jax.experimental import pallas as pl
from jax.experimental.pallas import tpu as pltpu


def _sepconv_fused_kernel(x_ref, wf_ref, o_ref, patch_ref, *, C, K, Ho, Wo):
    # x_ref:     (1, C, Hp, Wp)    padded input for this batch element
    # wf_ref:    (Cout, C*K*K)     fused (pointwise x depthwise) weights
    # o_ref:     (1, Cout, Ho*Wo)  lane-dense output (Ho*Wo = 256)
    # patch_ref: (C*K*K, Ho*Wo)    VMEM scratch: im2col patch matrix
    x = x_ref[0]  # (C, Hp, Wp)

    # im2col: 9 static shifted windows, each flattened onto the 256-wide lane axis.
    for kh in range(K):
        for kw in range(K):
            tap = kh * K + kw
            win = x[:, kh:kh + Ho, kw:kw + Wo]                  # (C, Ho, Wo)
            patch_ref[tap * C:(tap + 1) * C, :] = win.reshape(C, Ho * Wo)

    # Fused depthwise + pointwise conv as one MXU matmul: (Cout, C*K*K) @ (C*K*K, Ho*Wo).
    out = jnp.dot(wf_ref[...], patch_ref[...], preferred_element_type=jnp.float32)
    o_ref[0] = out.astype(o_ref.dtype)


def separable_conv2d(x, w_dw, w_pw, *, stride=1, padding=1, dilation=1):
    """x: (N, C, H, W); w_dw: (C, K, K); w_pw: (Cout, C). Returns (N, Cout, Ho, Wo)."""
    assert stride == 1 and dilation == 1, (
        "separable_conv2d Pallas kernel only implements stride=1, dilation=1")
    N, C, H, W = x.shape
    Cout = w_pw.shape[0]
    K = w_dw.shape[-1]
    Hp, Wp = H + 2 * padding, W + 2 * padding
    Ho, Wo = Hp - K + 1, Wp - K + 1

    # Fuse pointwise and depthwise weights in the wrapper (tiny, done once):
    #   wf[co, (kh*K + kw)*C + c] = w_pw[co, c] * w_dw[c, kh, kw]
    wf = (w_pw[:, None, None, :] * jnp.transpose(w_dw, (1, 2, 0))[None, :, :, :])
    wf = wf.reshape(Cout, K * K * C).astype(jnp.float32)

    x_pad = jnp.pad(x, ((0, 0), (0, 0), (padding, padding), (padding, padding)))

    kernel = functools.partial(_sepconv_fused_kernel, C=C, K=K, Ho=Ho, Wo=Wo)

    out_flat = pl.pallas_call(
        kernel,
        out_shape=jax.ShapeDtypeStruct((N, Cout, Ho * Wo), x.dtype),
        grid=(N,),
        in_specs=[
            pl.BlockSpec((1, C, Hp, Wp), lambda n: (n, 0, 0, 0)),
            pl.BlockSpec((Cout, K * K * C), lambda n: (0, 0)),
        ],
        out_specs=pl.BlockSpec((1, Cout, Ho * Wo), lambda n: (n, 0, 0)),
        scratch_shapes=[pltpu.VMEM((K * K * C, Ho * Wo), jnp.float32)],
        compiler_params=pltpu.CompilerParams(
            dimension_semantics=("parallel",)),
    )(x_pad, wf)

    return out_flat.reshape(N, Cout, Ho, Wo)


def _reference(x, w_dw, w_pw, *, padding=1):
    """Pure-JAX reference matching PyTorch SeparableConv2d.forward."""
    C = x.shape[1]
    y = jax.lax.conv_general_dilated(
        x, w_dw[:, None, :, :], window_strides=(1, 1),
        padding=[(padding, padding), (padding, padding)],
        feature_group_count=C,
        dimension_numbers=("NCHW", "OIHW", "NCHW"))
    y = jax.lax.conv_general_dilated(
        y, w_pw[:, :, None, None], window_strides=(1, 1), padding="VALID",
        dimension_numbers=("NCHW", "OIHW", "NCHW"))
    return y


if __name__ == "__main__":
    # Small shapes consistent with the module's forward pass.
    N, Cin, Cout, H, W, K, PAD = 2, 4, 8, 16, 16, 3, 1

    key = jax.random.PRNGKey(0)
    kx, kdw, kpw = jax.random.split(key, 3)

    x = jax.random.normal(kx, (N, Cin, H, W), dtype=jnp.float32)

    # Deterministic parameter init (Kaiming-uniform-style scaling, bias=False).
    fan_dw = 1 * K * K                        # groups=in_channels -> in_ch/group = 1
    bound_dw = 1.0 / (fan_dw ** 0.5)
    w_dw = jax.random.uniform(kdw, (Cin, K, K), jnp.float32, -bound_dw, bound_dw)

    fan_pw = Cin * 1 * 1
    bound_pw = 1.0 / (fan_pw ** 0.5)
    w_pw = jax.random.uniform(kpw, (Cout, Cin), jnp.float32, -bound_pw, bound_pw)

    out = separable_conv2d(x, w_dw, w_pw, padding=PAD)
    out = jax.block_until_ready(out)

    ref = jax.block_until_ready(_reference(x, w_dw, w_pw, padding=PAD))
    assert out.shape == (N, Cout, H, W)
    assert jnp.allclose(out, ref, atol=1e-4, rtol=1e-4), "mismatch vs reference"

    print("KERNEL_OK")
</pallas_src>

<mosaic_0001>
module attributes {stable_mosaic.version = 11 : i64} {
  func.func @_sepconv_fused_kernel(%arg0: i32, %arg1: memref<1x4x18x18xf32, #tpu.memory_space<vmem>>, %arg2: memref<8x36xf32, #tpu.memory_space<vmem>>, %arg3: memref<1x8x256xf32, #tpu.memory_space<vmem>>, %arg4: memref<36x256xf32, #tpu.memory_space<vmem>>) attributes {dimension_semantics = [#tpu.dimension_semantics<parallel>], iteration_bounds = array<i64: 2>, scalar_prefetch = 0 : i64, scratch_operands = 1 : i64, tpu.core_type = #tpu.core_type<tc>, window_params = [{transform_indices = @transform_0, window_bounds = array<i64: 1, 4, 18, 18>}, {pipeline_mode = #tpu.pipeline_mode<synchronous>, transform_indices = @transform_1, window_bounds = array<i64: 8, 36>}, {transform_indices = @transform_2, window_bounds = array<i64: 1, 8, 256>}]} {
    %c0 = arith.constant 0 : index
    %c0_0 = arith.constant 0 : index
    %c0_1 = arith.constant 0 : index
    %c0_2 = arith.constant 0 : index
    %0 = vector.load %arg1[%c0, %c0_0, %c0_1, %c0_2] : memref<1x4x18x18xf32, #tpu.memory_space<vmem>>, vector<1x4x18x18xf32>
    %1 = vector.shape_cast %0 : vector<1x4x18x18xf32> to vector<4x18x18xf32>
    %2 = vector.extract_strided_slice %1 {offsets = [0, 0, 0], sizes = [4, 16, 16], strides = [1, 1, 1]} : vector<4x18x18xf32> to vector<4x16x16xf32>
    %3 = vector.shape_cast %2 : vector<4x16x16xf32> to vector<4x256xf32>
    %c0_3 = arith.constant 0 : index
    %c0_4 = arith.constant 0 : index
    %4 = vector.load %arg4[%c0_3, %c0_4] : memref<36x256xf32, #tpu.memory_space<vmem>>, vector<4x256xf32>
    tpu.vector_store %arg4[%c0_3, %c0_4], %3 {strides = array<i32>} : memref<36x256xf32, #tpu.memory_space<vmem>>, vector<4x256xf32>,
    %5 = vector.extract_strided_slice %1 {offsets = [0, 0, 1], sizes = [4, 16, 16], strides = [1, 1, 1]} : vector<4x18x18xf32> to vector<4x16x16xf32>
    %6 = vector.shape_cast %5 : vector<4x16x16xf32> to vector<4x256xf32>
    %c4 = arith.constant 4 : index
    %c0_5 = arith.constant 0 : index
    %7 = vector.load %arg4[%c4, %c0_5] : memref<36x256xf32, #tpu.memory_space<vmem>>, vector<4x256xf32>
    tpu.vector_store %arg4[%c4, %c0_5], %6 {strides = array<i32>} : memref<36x256xf32, #tpu.memory_space<vmem>>, vector<4x256xf32>,
    %8 = vector.extract_strided_slice %1 {offsets = [0, 0, 2], sizes = [4, 16, 16], strides = [1, 1, 1]} : vector<4x18x18xf32> to vector<4x16x16xf32>
    %9 = vector.shape_cast %8 : vector<4x16x16xf32> to vector<4x256xf32>
    %c8 = arith.constant 8 : index
    %c0_6 = arith.constant 0 : index
    %10 = vector.load %arg4[%c8, %c0_6] : memref<36x256xf32, #tpu.memory_space<vmem>>, vector<4x256xf32>
    tpu.vector_store %arg4[%c8, %c0_6], %9 {strides = array<i32>} : memref<36x256xf32, #tpu.memory_space<vmem>>, vector<4x256xf32>,
    %11 = vector.extract_strided_slice %1 {offsets = [0, 1, 0], sizes = [4, 16, 16], strides = [1, 1, 1]} : vector<4x18x18xf32> to vector<4x16x16xf32>
    %12 = vector.shape_cast %11 : vector<4x16x16xf32> to vector<4x256xf32>
    %c12 = arith.constant 12 : index
    %c0_7 = arith.constant 0 : index
    %13 = vector.load %arg4[%c12, %c0_7] : memref<36x256xf32, #tpu.memory_space<vmem>>, vector<4x256xf32>
    tpu.vector_store %arg4[%c12, %c0_7], %12 {strides = array<i32>} : memref<36x256xf32, #tpu.memory_space<vmem>>, vector<4x256xf32>,
    %14 = vector.extract_strided_slice %1 {offsets = [0, 1, 1], sizes = [4, 16, 16], strides = [1, 1, 1]} : vector<4x18x18xf32> to vector<4x16x16xf32>
    %15 = vector.shape_cast %14 : vector<4x16x16xf32> to vector<4x256xf32>
    %c16 = arith.constant 16 : index
    %c0_8 = arith.constant 0 : index
    %16 = vector.load %arg4[%c16, %c0_8] : memref<36x256xf32, #tpu.memory_space<vmem>>, vector<4x256xf32>
    tpu.vector_store %arg4[%c16, %c0_8], %15 {strides = array<i32>} : memref<36x256xf32, #tpu.memory_space<vmem>>, vector<4x256xf32>,
    %17 = vector.extract_strided_slice %1 {offsets = [0, 1, 2], sizes = [4, 16, 16], strides = [1, 1, 1]} : vector<4x18x18xf32> to vector<4x16x16xf32>
    %18 = vector.shape_cast %17 : vector<4x16x16xf32> to vector<4x256xf32>
    %c20 = arith.constant 20 : index
    %c0_9 = arith.constant 0 : index
    %19 = vector.load %arg4[%c20, %c0_9] : memref<36x256xf32, #tpu.memory_space<vmem>>, vector<4x256xf32>
    tpu.vector_store %arg4[%c20, %c0_9], %18 {strides = array<i32>} : memref<36x256xf32, #tpu.memory_space<vmem>>, vector<4x256xf32>,
    %20 = vector.extract_strided_slice %1 {offsets = [0, 2, 0], sizes = [4, 16, 16], strides = [1, 1, 1]} : vector<4x18x18xf32> to vector<4x16x16xf32>
    %21 = vector.shape_cast %20 : vector<4x16x16xf32> to vector<4x256xf32>
    %c24 = arith.constant 24 : index
    %c0_10 = arith.constant 0 : index
    %22 = vector.load %arg4[%c24, %c0_10] : memref<36x256xf32, #tpu.memory_space<vmem>>, vector<4x256xf32>
    tpu.vector_store %arg4[%c24, %c0_10], %21 {strides = array<i32>} : memref<36x256xf32, #tpu.memory_space<vmem>>, vector<4x256xf32>,
    %23 = vector.extract_strided_slice %1 {offsets = [0, 2, 1], sizes = [4, 16, 16], strides = [1, 1, 1]} : vector<4x18x18xf32> to vector<4x16x16xf32>
    %24 = vector.shape_cast %23 : vector<4x16x16xf32> to vector<4x256xf32>
    %c28 = arith.constant 28 : index
    %c0_11 = arith.constant 0 : index
    %25 = vector.load %arg4[%c28, %c0_11] : memref<36x256xf32, #tpu.memory_space<vmem>>, vector<4x256xf32>
    tpu.vector_store %arg4[%c28, %c0_11], %24 {strides = array<i32>} : memref<36x256xf32, #tpu.memory_space<vmem>>, vector<4x256xf32>,
    %26 = vector.extract_strided_slice %1 {offsets = [0, 2, 2], sizes = [4, 16, 16], strides = [1, 1, 1]} : vector<4x18x18xf32> to vector<4x16x16xf32>
    %27 = vector.shape_cast %26 : vector<4x16x16xf32> to vector<4x256xf32>
    %c32 = arith.constant 32 : index
    %c0_12 = arith.constant 0 : index
    %28 = vector.load %arg4[%c32, %c0_12] : memref<36x256xf32, #tpu.memory_space<vmem>>, vector<4x256xf32>
    tpu.vector_store %arg4[%c32, %c0_12], %27 {strides = array<i32>} : memref<36x256xf32, #tpu.memory_space<vmem>>, vector<4x256xf32>,
    %c0_13 = arith.constant 0 : index
    %c0_14 = arith.constant 0 : index
    %29 = vector.load %arg2[%c0_13, %c0_14] : memref<8x36xf32, #tpu.memory_space<vmem>>, vector<8x36xf32>
    %c0_15 = arith.constant 0 : index
    %c0_16 = arith.constant 0 : index
    %30 = vector.load %arg4[%c0_15, %c0_16] : memref<36x256xf32, #tpu.memory_space<vmem>>, vector<36x256xf32>
    %cst = arith.constant dense<0.000000e+00> : vector<8x256xf32>
    %31 = tpu.matmul %29, %30, %cst {dimension_numbers = #tpu.dot_dimension_numbers<[1], [0], [0], [1], [0, 0, 1, 1], [], []>} : vector<8x36xf32>, vector<36x256xf32>, vector<8x256xf32> -> vector<8x256xf32>
    %c0_17 = arith.constant 0 : index
    %c0_18 = arith.constant 0 : index
    %c0_19 = arith.constant 0 : index
    %32 = vector.load %arg3[%c0_17, %c0_18, %c0_19] : memref<1x8x256xf32, #tpu.memory_space<vmem>>, vector<1x8x256xf32>
    %33 = vector.shape_cast %32 : vector<1x8x256xf32> to vector<8x256xf32>
    %34 = vector.shape_cast %31 : vector<8x256xf32> to vector<1x8x256xf32>
    tpu.vector_store %arg3[%c0_17, %c0_18, %c0_19], %34 {strides = array<i32>} : memref<1x8x256xf32, #tpu.memory_space<vmem>>, vector<1x8x256xf32>,
    return
  }
  func.func @transform_0(%arg0: i32) -> (i32, i32, i32, i32) {
    %c0_i32 = arith.constant 0 : i32
    %c0_i32_0 = arith.constant 0 : i32
    %c0_i32_1 = arith.constant 0 : i32
    %c0_i32_2 = arith.constant 0 : i32
    return %arg0, %c0_i32, %c0_i32_0, %c0_i32_1 : i32, i32, i32, i32
  }
  func.func @transform_1(%arg0: i32) -> (i32, i32) {
    %c0_i32 = arith.constant 0 : i32
    %c0_i32_0 = arith.constant 0 : i32
    %c0_i32_1 = arith.constant 0 : i32
    return %c0_i32, %c0_i32_0 : i32, i32
  }
  func.func @transform_2(%arg0: i32) -> (i32, i32, i32) {
    %c0_i32 = arith.constant 0 : i32
    %c0_i32_0 = arith.constant 0 : i32
    %c0_i32_1 = arith.constant 0 : i32
    return %arg0, %c0_i32, %c0_i32_0 : i32, i32, i32
  }
}

</mosaic_0001>

<llo_original>
// kernel: tpu_custom_call.1
$region0: #{tpu_custom_call.1}
  #allocation0 [shape = 'u32[]', space=smem, size = 0x4, offset = 0x4, fixed_abs, tag = 'smem constant byte address 0x4 - core index']
  #allocation1 [shape = 'u32[72,128]{1,0:T(1,128)}', space=vmem, size = 0x9000, scoped, tag = 'internal scratch']
  #allocation2 [shape = 'f32[36,256]{1,0:T(8,128)}', space=vmem, size = 0xa000, scoped, tag = 'scratch operand']
  %s0 = inlined_call_operand.vmem [shape: f32[2,4,18,18], index: 0, kind: input, shape index: {}]
  %s1 = inlined_call_operand.vmem [shape: f32[8,36], index: 1, kind: input, shape index: {}]
  %s2 = inlined_call_operand.hbm [shape: f32[2,8,256], index: 2, kind: output, shape index: {}]
  %s3 = sld [smem:[#allocation0]]
  $region41: #{tpu_custom_call.1} parent=0
    _
  %s5 = ssub.s32 1, %s3
  %s6 = scalar_select 0, %s5, %s3
  $region1: #{tpu_custom_call.1} parent=0
    #allocation3 [shape = 'u8[16384]{0}', space=vmem, size = 0x4000, scoped, tag = 'output window, operand 0']
    #allocation4 [shape = 's32[2]{0}', space=sflag, size = 0x8, scoped, tag = 'scoped memory for tpu_custom_call.1']
    %7 = vsyncpa [#allocation4], 0
    %s8 = scalar_lea.sflag [#allocation4], 1
    %9 = vsyncpa %s8, 0
    loop: start=0, step=1, limit=4
    $region2: #{tpu_custom_call.1} parent=1 // loop_pre_header
      _
    $region3: #{tpu_custom_call.1} parent=1 // loop_header
      %s11 = sphi 0, %s15
      %p12 = scmp.ge.s32.totalorder %s11, 4
      %s21 = sphi 0, %s23
      %s24 = sphi 0, %s21
      %s25 = sphi 0, %s24
      %s41 = sphi 0, %s25
      %s45 = sphi 0, %s45
      %s47 = sphi 0, %s45
      %s48 = sphi 0, %s47
      %s62 = sphi 0, %s48
      %s68 = sphi 0, %s70
      %s71 = sphi 0, %s68
      %s72 = sphi 0, %s71
      %s88 = sphi 0, %s72
    $region4: #{tpu_custom_call.1} parent=1 // loop_header_branch
      %14 = sbr.rel (%p12) target = $region8
    $region5: #{tpu_custom_call.1} parent=1 // loop_body
      %s16 = ssub.s32 %s11, 1
      %s17 = ssub.s32 %s11, 2
      %s18 = sadd.s32 %s11, 1
      %s19 = ssub.s32 %s11, %s18
      %p20 = scmp.eq.s32.totalorder %s19, 0
      %s22 = sadd.s32 %s21, 1
      %s23 = scalar_select %p20, %s21, %s22
      %p26 = pneg %p20
      %p27 = scmp.eq.s32.totalorder %s11, 1
      %p28 = por %p26, %p27
      %p29 = scmp.ne.s32.totalorder %s21, %s24
      %p30 = scmp.eq.s32.totalorder %s11, 0
      %p31 = por %p29, %p30
      %p32 = scmp.ne.s32.totalorder %s21, %s24
      %p33 = scmp.eq.s32.totalorder %s16, 1
      %p34 = por %p32, %p33
      %p35 = scmp.ne.s32.totalorder %s24, %s25
      %p36 = scmp.eq.s32.totalorder %s16, 0
      %p37 = por %p35, %p36
      %p38 = scmp.ne.s32.totalorder %s24, %s25
      %p39 = scmp.eq.s32.totalorder %s17, 1
      %p40 = por %p38, %p39
      %p42 = scmp.ne.s32.totalorder %s25, %s41
      %p43 = scmp.eq.s32.totalorder %s17, 0
      %p44 = por %p42, %p43
      %s46 = sadd.s32 %s45, 1
      %p49 = scmp.eq.s32.totalorder %s11, 1
      %p50 = scmp.ne.s32.totalorder %s45, %s47
      %p51 = scmp.eq.s32.totalorder %s11, 0
      %p52 = por %p50, %p51
      %p53 = scmp.ne.s32.totalorder %s45, %s47
      %p54 = scmp.eq.s32.totalorder %s16, 1
      %p55 = por %p53, %p54
      %p56 = scmp.ne.s32.totalorder %s47, %s48
      %p57 = scmp.eq.s32.totalorder %s16, 0
      %p58 = por %p56, %p57
      %p59 = scmp.ne.s32.totalorder %s47, %s48
      %p60 = scmp.eq.s32.totalorder %s17, 1
      %p61 = por %p59, %p60
      %p63 = scmp.ne.s32.totalorder %s48, %s62
      %p64 = scmp.eq.s32.totalorder %s17, 0
      %p65 = por %p63, %p64
      %s66 = ssub.s32 %s11, %s18
      %p67 = scmp.eq.s32.totalorder %s66, 0
      %s69 = sadd.s32 %s68, 1
      %s70 = scalar_select %p67, %s68, %s69
      %p73 = pneg %p67
      %p74 = scmp.eq.s32.totalorder %s11, 1
      %p75 = por %p73, %p74
      %p76 = scmp.ne.s32.totalorder %s68, %s71
      %p77 = scmp.eq.s32.totalorder %s11, 0
      %p78 = por %p76, %p77
      %p79 = scmp.ne.s32.totalorder %s68, %s71
      %p80 = scmp.eq.s32.totalorder %s16, 1
      %p81 = por %p79, %p80
      %p82 = scmp.ne.s32.totalorder %s71, %s72
      %p83 = scmp.eq.s32.totalorder %s16, 0
      %p84 = por %p82, %p83
      %p85 = scmp.ne.s32.totalorder %s71, %s72
      %p86 = scmp.eq.s32.totalorder %s17, 1
      %p87 = por %p85, %p86
      %p89 = scmp.ne.s32.totalorder %s72, %s88
      %p90 = scmp.eq.s32.totalorder %s17, 0
      %p91 = por %p89, %p90
      %p92 = scmp.le.s32.totalorder 1, %s11
      %p93 = scmp.lt.s32.totalorder %s11, 3
      %p94 = pnand %p92, %p93
      %p95 = pneg %p94
      // Predicated region
      $region9: #{tpu_custom_call.1} parent=5 // pred_check
        _
      $region10: #{tpu_custom_call.1} parent=5 // pred_check_branch
        %97 = sbr.rel (%p94) target = $region12
      $region11: #{tpu_custom_call.1} parent=5 // pred_region
        %s98 = ssub.s32 %s11, 1
        // Predicated region
        $region13: #{tpu_custom_call.1} parent=11 // pred_check
          %p99 = pneg %p58
        $region14: #{tpu_custom_call.1} parent=11 // pred_check_branch
          %101 = sbr.rel (%p99) target = $region16
        $region15: #{tpu_custom_call.1} parent=11 // pred_region
          _
        $region16: #{tpu_custom_call.1} parent=11 // pred_fallthru
          _
      $region12: #{tpu_custom_call.1} parent=5 // pred_fallthru
        _
      %p102 = scmp.lt.s32.totalorder %s11, 2
      // Predicated region
      $region17: #{tpu_custom_call.1} parent=5 // pred_check
        %p103 = pneg %p102
      $region18: #{tpu_custom_call.1} parent=5 // pred_check_branch
        %105 = sbr.rel (%p103) target = $region20
      $region19: #{tpu_custom_call.1} parent=5 // pred_region
        // Predicated region
        $region21: #{tpu_custom_call.1} parent=19 // pred_check
          %p106 = pneg %p31
        $region22: #{tpu_custom_call.1} parent=19 // pred_check_branch
          %108 = sbr.rel (%p106) target = $region24
        $region23: #{tpu_custom_call.1} parent=19 // pred_region
          %p109 = scmp.lt.s32.totalorder %s11, 1
          %s110 = scalar_select %p109, %s11, 1
          %s111 = smul.addr %s110, 12
          %s112 = smul.addr %s111, 8
          %s113 = scalar_lea.vmem %s0, %s112
        $region24: #{tpu_custom_call.1} parent=19 // pred_fallthru
          _
      $region20: #{tpu_custom_call.1} parent=5 // pred_fallthru
        _
      %p114 = scmp.le.s32.totalorder 1, %s11
      %p115 = scmp.lt.s32.totalorder %s11, 3
      %p116 = pnand %p114, %p115
      %p117 = pneg %p116
      // Predicated region
      $region25: #{tpu_custom_call.1} parent=5 // pred_check
        _
      $region26: #{tpu_custom_call.1} parent=5 // pred_check_branch
        %119 = sbr.rel (%p116) target = $region28
      $region27: #{tpu_custom_call.1} parent=5 // pred_region
        %s120 = ssub.s32 %s11, 1
        %p121 = scmp.lt.s32.totalorder %s16, 1
        %s122 = scalar_select %p121, %s16, 1
        %s123 = smul.addr %s122, 12
        %s124 = smul.addr %s123, 8
        %s125 = scalar_lea.vmem %s0, %s124
        %p126 = pneg %p37
        %p127 = pneg %p34
        %p128 = pneg %p58
        %p129 = pneg %p55
        %p130 = pneg %p84
        %p131 = pneg %p81
        %s132 = sand.u32 %s71, 1
        %s133 = scalar_lea.sflag [#allocation4], %s132
        %s134 = sand.u32 %s71, 1
        %s135 = smul.addr %s134, 16
        %s136 = scalar_lea.vmem [#allocation3], %s135
        %p137 = scmp.lt.s32.totalorder %s16, 1
        %s138 = scalar_select %p137, %s16, 1
        %s139 = smul.addr %s138, 12
        %s140 = smul.addr %s139, 8
        %s141 = scalar_lea.vmem %s0, %s140
        %v142 = vld [vmem:[%s141] sm:$0xff]
        %v143 = vld [vmem:[%s141 + $0x8] sm:$0xff]
        %v144 = vld [vmem:[%s141 + $0x10] sm:$0x3]
        %v145 = vld [vmem:[%s141 + $0x18] sm:$0xff]
        %v146 = vld [vmem:[%s141 + $0x20] sm:$0xff]
        %v147 = vld [vmem:[%s141 + $0x28] sm:$0x3]
        %v148 = vld [vmem:[%s141 + $0x30] sm:$0xff]
        %v149 = vld [vmem:[%s141 + $0x38] sm:$0xff]
        %v150 = vld [vmem:[%s141 + $0x40] sm:$0x3]
        %v151 = vld [vmem:[%s141 + $0x48] sm:$0xff]
        %v152 = vld [vmem:[%s141 + $0x50] sm:$0xff]
        %v153 = vld [vmem:[%s141 + $0x58] sm:$0x3]
        %v154 = vrot.slane %v148, 4
        %vm155 = vcmask 1047556
        %v156 = vsel %vm155, %v154, %v142
        %v157 = vrot.slane %v142, 4
        %v158 = vsel %vm155, %v148, %v157
        %v160 = vunpack.c.l.s4 1983009808
        %v161 = vunpack.c.0.s8 %v160
        %v162 = vperm.slane %v156, %v161
        %v164 = vunpack.c.l.s4 1983009808
        %v165 = vunpack.c.0.s8 %v164
        %v166 = vperm.slane %v158, %v165
        %v167 = vrot.slane %v151, 4
        %v168 = vsel %vm155, %v167, %v145
        %v169 = vrot.slane %v145, 4
        %v170 = vsel %vm155, %v151, %v169
        %v172 = vunpack.c.l.s4 1983009808
        %v173 = vunpack.c.0.s8 %v172
        %v174 = vperm.slane %v168, %v173
        %v176 = vunpack.c.l.s4 1983009808
        %v177 = vunpack.c.0.s8 %v176
        %v178 = vperm.slane %v170, %v177
        %v179 = vrot.slane %v174, 4
        %v180 = vsel %vm155, %v179, %v162
        %v181 = vrot.slane %v162, 4
        %v182 = vsel %vm155, %v174, %v181
        %v184 = vunpack.c.l.s4 1934713408
        %v185 = vunpack.c.0.s8 %v184
        %v186 = vperm.slane %v180, %v185
        %v188 = vunpack.c.l.s4 1934713408
        %v189 = vunpack.c.0.s8 %v188
        %v190 = vperm.slane %v182, %v189
        %v191 = vrot.slane %v178, 4
        %v192 = vsel %vm155, %v191, %v166
        %v193 = vrot.slane %v166, 4
        %v194 = vsel %vm155, %v178, %v193
        %v196 = vunpack.c.l.s4 1934713408
        %v197 = vunpack.c.0.s8 %v196
        %v198 = vperm.slane %v192, %v197
        %v200 = vunpack.c.l.s4 1934713408
        %v201 = vunpack.c.0.s8 %v200
        %v202 = vperm.slane %v194, %v201
        %v203 = vrot.slane %v186, 4
        %v204 = vsel %vm155, 0.0, %v203
        %v205 = vrot.slane %v190, 4
        %v206 = vsel %vm155, 0.0, %v205
        %v207 = vrot.slane %v198, 4
        %v208 = vsel %vm155, 0.0, %v207
        %v209 = vrot.slane %v202, 4
        %v210 = vsel %vm155, 0.0, %v209
        %v211 = vrot.slane %v149, 4
        %v212 = vsel %vm155, %v211, %v143
        %v213 = vrot.slane %v143, 4
        %v214 = vsel %vm155, %v149, %v213
        %v216 = vunpack.c.l.s4 1983009808
        %v217 = vunpack.c.0.s8 %v216
        %v218 = vperm.slane %v212, %v217
        %v220 = vunpack.c.l.s4 1983009808
        %v221 = vunpack.c.0.s8 %v220
        %v222 = vperm.slane %v214, %v221
        %v223 = vrot.slane %v152, 4
        %v224 = vsel %vm155, %v223, %v146
        %v225 = vrot.slane %v146, 4
        %v226 = vsel %vm155, %v152, %v225
        %v228 = vunpack.c.l.s4 1983009808
        %v229 = vunpack.c.0.s8 %v228
        %v230 = vperm.slane %v224, %v229
        %v232 = vunpack.c.l.s4 1983009808
        %v233 = vunpack.c.0.s8 %v232
        %v234 = vperm.slane %v226, %v233
        %v235 = vrot.slane %v230, 4
        %v236 = vsel %vm155, %v235, %v218
        %v237 = vrot.slane %v218, 4
        %v238 = vsel %vm155, %v230, %v237
        %v240 = vunpack.c.l.s4 1934713408
        %v241 = vunpack.c.0.s8 %v240
        %v242 = vperm.slane %v236, %v241
        %v244 = vunpack.c.l.s4 1934713408
        %v245 = vunpack.c.0.s8 %v244
        %v246 = vperm.slane %v238, %v245
        %v247 = vrot.slane %v234, 4
        %v248 = vsel %vm155, %v247, %v222
        %v249 = vrot.slane %v222, 4
        %v250 = vsel %vm155, %v234, %v249
        %v252 = vunpack.c.l.s4 1934713408
        %v253 = vunpack.c.0.s8 %v252
        %v254 = vperm.slane %v248, %v253
        %v256 = vunpack.c.l.s4 1934713408
        %v257 = vunpack.c.0.s8 %v256
        %v258 = vperm.slane %v250, %v257
        %v259 = vrot.slane %v242, 4
        %v260 = vsel %vm155, 0.0, %v259
        %v261 = vrot.slane %v246, 4
        %v262 = vsel %vm155, 0.0, %v261
        %v263 = vrot.slane %v254, 4
        %v264 = vsel %vm155, 0.0, %v263
        %v265 = vrot.slane %v258, 4
        %v266 = vsel %vm155, 0.0, %v265
        %268 = vrot.lane.b32.xlu0 %v204, 16
        %v269 = vpop.permute.xlu0 %268
        %272 = vrot.lane.b32.xlu0 %v190, 32
        %v273 = vpop.permute.xlu0 %272
        %276 = vrot.lane.b32.xlu0 %v206, 48
        %v277 = vpop.permute.xlu0 %276
        %280 = vrot.lane.b32.xlu0 %v198, 64
        %v281 = vpop.permute.xlu0 %280
        %284 = vrot.lane.b32.xlu0 %v208, 80
        %v285 = vpop.permute.xlu0 %284
        %288 = vrot.lane.b32.xlu0 %v202, 96
        %v289 = vpop.permute.xlu0 %288
        %292 = vrot.lane.b32.xlu0 %v210, 112
        %v293 = vpop.permute.xlu0 %292
        %296 = vrot.lane.b32.xlu0 %v260, 16
        %v297 = vpop.permute.xlu0 %296
        %300 = vrot.lane.b32.xlu0 %v246, 32
        %v301 = vpop.permute.xlu0 %300
        %304 = vrot.lane.b32.xlu0 %v262, 48
        %v305 = vpop.permute.xlu0 %304
        %308 = vrot.lane.b32.xlu0 %v254, 64
        %v309 = vpop.permute.xlu0 %308
        %312 = vrot.lane.b32.xlu0 %v264, 80
        %v313 = vpop.permute.xlu0 %312
        %316 = vrot.lane.b32.xlu0 %v258, 96
        %v317 = vpop.permute.xlu0 %316
        %320 = vrot.lane.b32.xlu0 %v266, 112
        %v321 = vpop.permute.xlu0 %320
        %vm323 = vcmask 130048
        %v324 = vsel %vm323, %v186, %v269
        %vm325 = vcmask 261120
        %v326 = vsel %vm325, %v324, %v273
        %vm327 = vcmask 392192
        %v328 = vsel %vm327, %v326, %v277
        %vm329 = vcmask 523264
        %v330 = vsel %vm329, %v328, %v281
        %vm331 = vcmask 654336
        %v332 = vsel %vm331, %v330, %v285
        %vm333 = vcmask 785408
        %v334 = vsel %vm333, %v332, %v289
        %vm335 = vcmask 916480
        %v336 = vsel %vm335, %v334, %v293
        %v337 = vsel %vm323, %v242, %v297
        %v338 = vsel %vm325, %v337, %v301
        %v339 = vsel %vm327, %v338, %v305
        %v340 = vsel %vm329, %v339, %v309
        %v341 = vsel %vm331, %v340, %v313
        %v342 = vsel %vm333, %v341, %v317
        %v343 = vsel %vm335, %v342, %v321
        %344 = vst [vmem:[#allocation2] sm:$0xf] %v336
        %345 = vst [vmem:[#allocation2 + $0x8] sm:$0xf] %v343
        %354 = vrot.lane.b32.xlu0 %v142, 127
        %v355 = vpop.permute.xlu0 %354
        %356 = vrot.lane.b32.xlu0 %v143, 127
        %v357 = vpop.permute.xlu0 %356
        %358 = vrot.lane.b32.xlu0 %v145, 127
        %v359 = vpop.permute.xlu0 %358
        %360 = vrot.lane.b32.xlu0 %v146, 127
        %v361 = vpop.permute.xlu0 %360
        %362 = vrot.lane.b32.xlu0 %v148, 127
        %v363 = vpop.permute.xlu0 %362
        %364 = vrot.lane.b32.xlu0 %v149, 127
        %v365 = vpop.permute.xlu0 %364
        %366 = vrot.lane.b32.xlu0 %v151, 127
        %v367 = vpop.permute.xlu0 %366
        %368 = vrot.lane.b32.xlu0 %v152, 127
        %v369 = vpop.permute.xlu0 %368
        %v378 = vrot.slane %v363, 4
        %v379 = vsel %vm155, %v378, %v355
        %v380 = vrot.slane %v355, 4
        %v381 = vsel %vm155, %v363, %v380
        %v383 = vunpack.c.l.s4 1983009808
        %v384 = vunpack.c.0.s8 %v383
        %v385 = vperm.slane %v379, %v384
        %v387 = vunpack.c.l.s4 1983009808
        %v388 = vunpack.c.0.s8 %v387
        %v389 = vperm.slane %v381, %v388
        %v390 = vrot.slane %v367, 4
        %v391 = vsel %vm155, %v390, %v359
        %v392 = vrot.slane %v359, 4
        %v393 = vsel %vm155, %v367, %v392
        %v395 = vunpack.c.l.s4 1983009808
        %v396 = vunpack.c.0.s8 %v395
        %v397 = vperm.slane %v391, %v396
        %v399 = vunpack.c.l.s4 1983009808
        %v400 = vunpack.c.0.s8 %v399
        %v401 = vperm.slane %v393, %v400
        %v402 = vrot.slane %v397, 4
        %v403 = vsel %vm155, %v402, %v385
        %v404 = vrot.slane %v385, 4
        %v405 = vsel %vm155, %v397, %v404
        %v407 = vunpack.c.l.s4 1934713408
        %v408 = vunpack.c.0.s8 %v407
        %v409 = vperm.slane %v403, %v408
        %v411 = vunpack.c.l.s4 1934713408
        %v412 = vunpack.c.0.s8 %v411
        %v413 = vperm.slane %v405, %v412
        %v414 = vrot.slane %v401, 4
        %v415 = vsel %vm155, %v414, %v389
        %v416 = vrot.slane %v389, 4
        %v417 = vsel %vm155, %v401, %v416
        %v419 = vunpack.c.l.s4 1934713408
        %v420 = vunpack.c.0.s8 %v419
        %v421 = vperm.slane %v415, %v420
        %v423 = vunpack.c.l.s4 1934713408
        %v424 = vunpack.c.0.s8 %v423
        %v425 = vperm.slane %v417, %v424
        %v426 = vrot.slane %v409, 4
        %v427 = vsel %vm155, 0.0, %v426
        %v428 = vrot.slane %v413, 4
        %v429 = vsel %vm155, 0.0, %v428
        %v430 = vrot.slane %v421, 4
        %v431 = vsel %vm155, 0.0, %v430
        %v432 = vrot.slane %v425, 4
        %v433 = vsel %vm155, 0.0, %v432
        %v434 = vrot.slane %v365, 4
        %v435 = vsel %vm155, %v434, %v357
        %v436 = vrot.slane %v357, 4
        %v437 = vsel %vm155, %v365, %v436
        %v439 = vunpack.c.l.s4 1983009808
        %v440 = vunpack.c.0.s8 %v439
        %v441 = vperm.slane %v435, %v440
        %v443 = vunpack.c.l.s4 1983009808
        %v444 = vunpack.c.0.s8 %v443
        %v445 = vperm.slane %v437, %v444
        %v446 = vrot.slane %v369, 4
        %v447 = vsel %vm155, %v446, %v361
        %v448 = vrot.slane %v361, 4
        %v449 = vsel %vm155, %v369, %v448
        %v451 = vunpack.c.l.s4 1983009808
        %v452 = vunpack.c.0.s8 %v451
        %v453 = vperm.slane %v447, %v452
        %v455 = vunpack.c.l.s4 1983009808
        %v456 = vunpack.c.0.s8 %v455
        %v457 = vperm.slane %v449, %v456
        %v458 = vrot.slane %v453, 4
        %v459 = vsel %vm155, %v458, %v441
        %v460 = vrot.slane %v441, 4
        %v461 = vsel %vm155, %v453, %v460
        %v463 = vunpack.c.l.s4 1934713408
        %v464 = vunpack.c.0.s8 %v463
        %v465 = vperm.slane %v459, %v464
        %v467 = vunpack.c.l.s4 1934713408
        %v468 = vunpack.c.0.s8 %v467
        %v469 = vperm.slane %v461, %v468
        %v470 = vrot.slane %v457, 4
        %v471 = vsel %vm155, %v470, %v445
        %v472 = vrot.slane %v445, 4
        %v473 = vsel %vm155, %v457, %v472
        %v475 = vunpack.c.l.s4 1934713408
        %v476 = vunpack.c.0.s8 %v475
        %v477 = vperm.slane %v471, %v476
        %v479 = vunpack.c.l.s4 1934713408
        %v480 = vunpack.c.0.s8 %v479
        %v481 = vperm.slane %v473, %v480
        %v482 = vrot.slane %v465, 4
        %v483 = vsel %vm155, 0.0, %v482
        %v484 = vrot.slane %v469, 4
        %v485 = vsel %vm155, 0.0, %v484
        %v486 = vrot.slane %v477, 4
        %v487 = vsel %vm155, 0.0, %v486
        %v488 = vrot.slane %v481, 4
        %v489 = vsel %vm155, 0.0, %v488
        %491 = vrot.lane.b32.xlu0 %v427, 16
        %v492 = vpop.permute.xlu0 %491
        %495 = vrot.lane.b32.xlu0 %v413, 32
        %v496 = vpop.permute.xlu0 %495
        %499 = vrot.lane.b32.xlu0 %v429, 48
        %v500 = vpop.permute.xlu0 %499
        %503 = vrot.lane.b32.xlu0 %v421, 64
        %v504 = vpop.permute.xlu0 %503
        %507 = vrot.lane.b32.xlu0 %v431, 80
        %v508 = vpop.permute.xlu0 %507
        %511 = vrot.lane.b32.xlu0 %v425, 96
        %v512 = vpop.permute.xlu0 %511
        %515 = vrot.lane.b32.xlu0 %v433, 112
        %v516 = vpop.permute.xlu0 %515
        %519 = vrot.lane.b32.xlu0 %v483, 16
        %v520 = vpop.permute.xlu0 %519
        %523 = vrot.lane.b32.xlu0 %v469, 32
        %v524 = vpop.permute.xlu0 %523
        %527 = vrot.lane.b32.xlu0 %v485, 48
        %v528 = vpop.permute.xlu0 %527
        %531 = vrot.lane.b32.xlu0 %v477, 64
        %v532 = vpop.permute.xlu0 %531
        %535 = vrot.lane.b32.xlu0 %v487, 80
        %v536 = vpop.permute.xlu0 %535
        %539 = vrot.lane.b32.xlu0 %v481, 96
        %v540 = vpop.permute.xlu0 %539
        %543 = vrot.lane.b32.xlu0 %v489, 112
        %v544 = vpop.permute.xlu0 %543
        %v546 = vsel %vm323, %v409, %v492
        %v547 = vsel %vm325, %v546, %v496
        %v548 = vsel %vm327, %v547, %v500
        %v549 = vsel %vm329, %v548, %v504
        %v550 = vsel %vm331, %v549, %v508
        %v551 = vsel %vm333, %v550, %v512
        %v552 = vsel %vm335, %v551, %v516
        %v553 = vsel %vm323, %v465, %v520
        %v554 = vsel %vm325, %v553, %v524
        %v555 = vsel %vm327, %v554, %v528
        %v556 = vsel %vm329, %v555, %v532
        %v557 = vsel %vm331, %v556, %v536
        %v558 = vsel %vm333, %v557, %v540
        %v559 = vsel %vm335, %v558, %v544
        %v562 = vrot.slane %v552, 4
        %v563 = vrot.slane %v559, 4
        %566 = vst [vmem:[#allocation2] sm:$0xf0] %v562
        %567 = vst [vmem:[#allocation2 + $0x8] sm:$0xf0] %v563
        %568 = vrot.lane.b32.xlu0 %v142, 126
        %v569 = vpop.permute.xlu0 %568
        %570 = vrot.lane.b32.xlu0 %v143, 126
        %v571 = vpop.permute.xlu0 %570
        %572 = vrot.lane.b32.xlu0 %v145, 126
        %v573 = vpop.permute.xlu0 %572
        %574 = vrot.lane.b32.xlu0 %v146, 126
        %v575 = vpop.permute.xlu0 %574
        %576 = vrot.lane.b32.xlu0 %v148, 126
        %v577 = vpop.permute.xlu0 %576
        %578 = vrot.lane.b32.xlu0 %v149, 126
        %v579 = vpop.permute.xlu0 %578
        %580 = vrot.lane.b32.xlu0 %v151, 126
        %v581 = vpop.permute.xlu0 %580
        %582 = vrot.lane.b32.xlu0 %v152, 126
        %v583 = vpop.permute.xlu0 %582
        %v592 = vrot.slane %v577, 4
        %v593 = vsel %vm155, %v592, %v569
        %v594 = vrot.slane %v569, 4
        %v595 = vsel %vm155, %v577, %v594
        %v597 = vunpack.c.l.s4 1983009808
        %v598 = vunpack.c.0.s8 %v597
        %v599 = vperm.slane %v593, %v598
        %v601 = vunpack.c.l.s4 1983009808
        %v602 = vunpack.c.0.s8 %v601
        %v603 = vperm.slane %v595, %v602
        %v604 = vrot.slane %v581, 4
        %v605 = vsel %vm155, %v604, %v573
        %v606 = vrot.slane %v573, 4
        %v607 = vsel %vm155, %v581, %v606
        %v609 = vunpack.c.l.s4 1983009808
        %v610 = vunpack.c.0.s8 %v609
        %v611 = vperm.slane %v605, %v610
        %v613 = vunpack.c.l.s4 1983009808
        %v614 = vunpack.c.0.s8 %v613
        %v615 = vperm.slane %v607, %v614
        %v616 = vrot.slane %v611, 4
        %v617 = vsel %vm155, %v616, %v599
        %v618 = vrot.slane %v599, 4
        %v619 = vsel %vm155, %v611, %v618
        %v621 = vunpack.c.l.s4 1934713408
        %v622 = vunpack.c.0.s8 %v621
        %v623 = vperm.slane %v617, %v622
        %v625 = vunpack.c.l.s4 1934713408
        %v626 = vunpack.c.0.s8 %v625
        %v627 = vperm.slane %v619, %v626
        %v628 = vrot.slane %v615, 4
        %v629 = vsel %vm155, %v628, %v603
        %v630 = vrot.slane %v603, 4
        %v631 = vsel %vm155, %v615, %v630
        %v633 = vunpack.c.l.s4 1934713408
        %v634 = vunpack.c.0.s8 %v633
        %v635 = vperm.slane %v629, %v634
        %v637 = vunpack.c.l.s4 1934713408
        %v638 = vunpack.c.0.s8 %v637
        %v639 = vperm.slane %v631, %v638
        %v640 = vrot.slane %v623, 4
        %v641 = vsel %vm155, 0.0, %v640
        %v642 = vrot.slane %v627, 4
        %v643 = vsel %vm155, 0.0, %v642
        %v644 = vrot.slane %v635, 4
        %v645 = vsel %vm155, 0.0, %v644
        %v646 = vrot.slane %v639, 4
        %v647 = vsel %vm155, 0.0, %v646
        %v648 = vrot.slane %v579, 4
        %v649 = vsel %vm155, %v648, %v571
        %v650 = vrot.slane %v571, 4
        %v651 = vsel %vm155, %v579, %v650
        %v653 = vunpack.c.l.s4 1983009808
        %v654 = vunpack.c.0.s8 %v653
        %v655 = vperm.slane %v649, %v654
        %v657 = vunpack.c.l.s4 1983009808
        %v658 = vunpack.c.0.s8 %v657
        %v659 = vperm.slane %v651, %v658
        %v660 = vrot.slane %v583, 4
        %v661 = vsel %vm155, %v660, %v575
        %v662 = vrot.slane %v575, 4
        %v663 = vsel %vm155, %v583, %v662
        %v665 = vunpack.c.l.s4 1983009808
        %v666 = vunpack.c.0.s8 %v665
        %v667 = vperm.slane %v661, %v666
        %v669 = vunpack.c.l.s4 1983009808
        %v670 = vunpack.c.0.s8 %v669
        %v671 = vperm.slane %v663, %v670
        %v672 = vrot.slane %v667, 4
        %v673 = vsel %vm155, %v672, %v655
        %v674 = vrot.slane %v655, 4
        %v675 = vsel %vm155, %v667, %v674
        %v677 = vunpack.c.l.s4 1934713408
        %v678 = vunpack.c.0.s8 %v677
        %v679 = vperm.slane %v673, %v678
        %v681 = vunpack.c.l.s4 1934713408
        %v682 = vunpack.c.0.s8 %v681
        %v683 = vperm.slane %v675, %v682
        %v684 = vrot.slane %v671, 4
        %v685 = vsel %vm155, %v684, %v659
        %v686 = vrot.slane %v659, 4
        %v687 = vsel %vm155, %v671, %v686
        %v689 = vunpack.c.l.s4 1934713408
        %v690 = vunpack.c.0.s8 %v689
        %v691 = vperm.slane %v685, %v690
        %v693 = vunpack.c.l.s4 1934713408
        %v694 = vunpack.c.0.s8 %v693
        %v695 = vperm.slane %v687, %v694
        %v696 = vrot.slane %v679, 4
        %v697 = vsel %vm155, 0.0, %v696
        %v698 = vrot.slane %v683, 4
        %v699 = vsel %vm155, 0.0, %v698
        %v700 = vrot.slane %v691, 4
        %v701 = vsel %vm155, 0.0, %v700
        %v702 = vrot.slane %v695, 4
        %v703 = vsel %vm155, 0.0, %v702
        %705 = vrot.lane.b32.xlu0 %v641, 16
        %v706 = vpop.permute.xlu0 %705
        %709 = vrot.lane.b32.xlu0 %v627, 32
        %v710 = vpop.permute.xlu0 %709
        %713 = vrot.lane.b32.xlu0 %v643, 48
        %v714 = vpop.permute.xlu0 %713
        %717 = vrot.lane.b32.xlu0 %v635, 64
        %v718 = vpop.permute.xlu0 %717
        %721 = vrot.lane.b32.xlu0 %v645, 80
        %v722 = vpop.permute.xlu0 %721
        %725 = vrot.lane.b32.xlu0 %v639, 96
        %v726 = vpop.permute.xlu0 %725
        %729 = vrot.lane.b32.xlu0 %v647, 112
        %v730 = vpop.permute.xlu0 %729
        %733 = vrot.lane.b32.xlu0 %v697, 16
        %v734 = vpop.permute.xlu0 %733
        %737 = vrot.lane.b32.xlu0 %v683, 32
        %v738 = vpop.permute.xlu0 %737
        %741 = vrot.lane.b32.xlu0 %v699, 48
        %v742 = vpop.permute.xlu0 %741
        %745 = vrot.lane.b32.xlu0 %v691, 64
        %v746 = vpop.permute.xlu0 %745
        %749 = vrot.lane.b32.xlu0 %v701, 80
        %v750 = vpop.permute.xlu0 %749
        %753 = vrot.lane.b32.xlu0 %v695, 96
        %v754 = vpop.permute.xlu0 %753
        %757 = vrot.lane.b32.xlu0 %v703, 112
        %v758 = vpop.permute.xlu0 %757
        %v760 = vsel %vm323, %v623, %v706
        %v761 = vsel %vm325, %v760, %v710
        %v762 = vsel %vm327, %v761, %v714
        %v763 = vsel %vm329, %v762, %v718
        %v764 = vsel %vm331, %v763, %v722
        %v765 = vsel %vm333, %v764, %v726
        %v766 = vsel %vm335, %v765, %v730
        %v767 = vsel %vm323, %v679, %v734
        %v768 = vsel %vm325, %v767, %v738
        %v769 = vsel %vm327, %v768, %v742
        %v770 = vsel %vm329, %v769, %v746
        %v771 = vsel %vm331, %v770, %v750
        %v772 = vsel %vm333, %v771, %v754
        %v773 = vsel %vm335, %v772, %v758
        %774 = vst [vmem:[#allocation2 + $0x10] sm:$0xf] %v766
        %775 = vst [vmem:[#allocation2 + $0x18] sm:$0xf] %v773
        %vm780 = vcmask 1046528
        %v781 = vrot.slane %v142, 1
        %v782 = vrot.slane %v143, 1
        %v783 = vsel %vm780, %v781, %v782
        %v784 = vrot.slane %v144, 1
        %v785 = vsel %vm780, %v782, %v784
        %v786 = vrot.slane %v145, 1
        %v787 = vrot.slane %v146, 1
        %v788 = vsel %vm780, %v786, %v787
        %v789 = vrot.slane %v147, 1
        %v790 = vsel %vm780, %v787, %v789
        %v791 = vrot.slane %v148, 1
        %v792 = vrot.slane %v149, 1
        %v793 = vsel %vm780, %v791, %v792
        %v794 = vrot.slane %v150, 1
        %v795 = vsel %vm780, %v792, %v794
        %v796 = vrot.slane %v151, 1
        %v797 = vrot.slane %v152, 1
        %v798 = vsel %vm780, %v796, %v797
        %v799 = vrot.slane %v153, 1
        %v800 = vsel %vm780, %v797, %v799
        %v809 = vrot.slane %v793, 4
        %v810 = vsel %vm155, %v809, %v783
        %v811 = vrot.slane %v783, 4
        %v812 = vsel %vm155, %v793, %v811
        %v814 = vunpack.c.l.s4 1983009808
        %v815 = vunpack.c.0.s8 %v814
        %v816 = vperm.slane %v810, %v815
        %v818 = vunpack.c.l.s4 1983009808
        %v819 = vunpack.c.0.s8 %v818
        %v820 = vperm.slane %v812, %v819
        %v821 = vrot.slane %v798, 4
        %v822 = vsel %vm155, %v821, %v788
        %v823 = vrot.slane %v788, 4
        %v824 = vsel %vm155, %v798, %v823
        %v826 = vunpack.c.l.s4 1983009808
        %v827 = vunpack.c.0.s8 %v826
        %v828 = vperm.slane %v822, %v827
        %v830 = vunpack.c.l.s4 1983009808
        %v831 = vunpack.c.0.s8 %v830
        %v832 = vperm.slane %v824, %v831
        %v833 = vrot.slane %v828, 4
        %v834 = vsel %vm155, %v833, %v816
        %v835 = vrot.slane %v816, 4
        %v836 = vsel %vm155, %v828, %v835
        %v838 = vunpack.c.l.s4 1934713408
        %v839 = vunpack.c.0.s8 %v838
        %v840 = vperm.slane %v834, %v839
        %v842 = vunpack.c.l.s4 1934713408
        %v843 = vunpack.c.0.s8 %v842
        %v844 = vperm.slane %v836, %v843
        %v845 = vrot.slane %v832, 4
        %v846 = vsel %vm155, %v845, %v820
        %v847 = vrot.slane %v820, 4
        %v848 = vsel %vm155, %v832, %v847
        %v850 = vunpack.c.l.s4 1934713408
        %v851 = vunpack.c.0.s8 %v850
        %v852 = vperm.slane %v846, %v851
        %v854 = vunpack.c.l.s4 1934713408
        %v855 = vunpack.c.0.s8 %v854
        %v856 = vperm.slane %v848, %v855
        %v857 = vrot.slane %v840, 4
        %v858 = vsel %vm155, 0.0, %v857
        %v859 = vrot.slane %v844, 4
        %v860 = vsel %vm155, 0.0, %v859
        %v861 = vrot.slane %v852, 4
        %v862 = vsel %vm155, 0.0, %v861
        %v863 = vrot.slane %v856, 4
        %v864 = vsel %vm155, 0.0, %v863
        %v865 = vrot.slane %v795, 4
        %v866 = vsel %vm155, %v865, %v785
        %v867 = vrot.slane %v785, 4
        %v868 = vsel %vm155, %v795, %v867
        %v870 = vunpack.c.l.s4 1983009808
        %v871 = vunpack.c.0.s8 %v870
        %v872 = vperm.slane %v866, %v871
        %v874 = vunpack.c.l.s4 1983009808
        %v875 = vunpack.c.0.s8 %v874
        %v876 = vperm.slane %v868, %v875
        %v877 = vrot.slane %v800, 4
        %v878 = vsel %vm155, %v877, %v790
        %v879 = vrot.slane %v790, 4
        %v880 = vsel %vm155, %v800, %v879
        %v882 = vunpack.c.l.s4 1983009808
        %v883 = vunpack.c.0.s8 %v882
        %v884 = vperm.slane %v878, %v883
        %v886 = vunpack.c.l.s4 1983009808
        %v887 = vunpack.c.0.s8 %v886
        %v888 = vperm.slane %v880, %v887
        %v889 = vrot.slane %v884, 4
        %v890 = vsel %vm155, %v889, %v872
        %v891 = vrot.slane %v872, 4
        %v892 = vsel %vm155, %v884, %v891
        %v894 = vunpack.c.l.s4 1934713408
        %v895 = vunpack.c.0.s8 %v894
        %v896 = vperm.slane %v890, %v895
        %v898 = vunpack.c.l.s4 1934713408
        %v899 = vunpack.c.0.s8 %v898
        %v900 = vperm.slane %v892, %v899
        %v901 = vrot.slane %v888, 4
        %v902 = vsel %vm155, %v901, %v876
        %v903 = vrot.slane %v876, 4
        %v904 = vsel %vm155, %v888, %v903
        %v906 = vunpack.c.l.s4 1934713408
        %v907 = vunpack.c.0.s8 %v906
        %v908 = vperm.slane %v902, %v907
        %v910 = vunpack.c.l.s4 1934713408
        %v911 = vunpack.c.0.s8 %v910
        %v912 = vperm.slane %v904, %v911
        %v913 = vrot.slane %v896, 4
        %v914 = vsel %vm155, 0.0, %v913
        %v915 = vrot.slane %v900, 4
        %v916 = vsel %vm155, 0.0, %v915
        %v917 = vrot.slane %v908, 4
        %v918 = vsel %vm155, 0.0, %v917
        %v919 = vrot.slane %v912, 4
        %v920 = vsel %vm155, 0.0, %v919
        %922 = vrot.lane.b32.xlu0 %v858, 16
        %v923 = vpop.permute.xlu0 %922
        %926 = vrot.lane.b32.xlu0 %v844, 32
        %v927 = vpop.permute.xlu0 %926
        %930 = vrot.lane.b32.xlu0 %v860, 48
        %v931 = vpop.permute.xlu0 %930
        %934 = vrot.lane.b32.xlu0 %v852, 64
        %v935 = vpop.permute.xlu0 %934
        %938 = vrot.lane.b32.xlu0 %v862, 80
        %v939 = vpop.permute.xlu0 %938
        %942 = vrot.lane.b32.xlu0 %v856, 96
        %v943 = vpop.permute.xlu0 %942
        %946 = vrot.lane.b32.xlu0 %v864, 112
        %v947 = vpop.permute.xlu0 %946
        %950 = vrot.lane.b32.xlu0 %v914, 16
        %v951 = vpop.permute.xlu0 %950
        %954 = vrot.lane.b32.xlu0 %v900, 32
        %v955 = vpop.permute.xlu0 %954
        %958 = vrot.lane.b32.xlu0 %v916, 48
        %v959 = vpop.permute.xlu0 %958
        %962 = vrot.lane.b32.xlu0 %v908, 64
        %v963 = vpop.permute.xlu0 %962
        %966 = vrot.lane.b32.xlu0 %v918, 80
        %v967 = vpop.permute.xlu0 %966
        %970 = vrot.lane.b32.xlu0 %v912, 96
        %v971 = vpop.permute.xlu0 %970
        %974 = vrot.lane.b32.xlu0 %v920, 112
        %v975 = vpop.permute.xlu0 %974
        %v977 = vsel %vm323, %v840, %v923
        %v978 = vsel %vm325, %v977, %v927
        %v979 = vsel %vm327, %v978, %v931
        %v980 = vsel %vm329, %v979, %v935
        %v981 = vsel %vm331, %v980, %v939
        %v982 = vsel %vm333, %v981, %v943
        %v983 = vsel %vm335, %v982, %v947
        %v984 = vsel %vm323, %v896, %v951
        %v985 = vsel %vm325, %v984, %v955
        %v986 = vsel %vm327, %v985, %v959
        %v987 = vsel %vm329, %v986, %v963
        %v988 = vsel %vm331, %v987, %v967
        %v989 = vsel %vm333, %v988, %v971
        %v990 = vsel %vm335, %v989, %v975
        %v993 = vrot.slane %v983, 4
        %v994 = vrot.slane %v990, 4
        %997 = vst [vmem:[#allocation2 + $0x10] sm:$0xf0] %v993
        %998 = vst [vmem:[#allocation2 + $0x18] sm:$0xf0] %v994
        %999 = vrot.lane.b32.xlu0 %v783, 127
        %v1000 = vpop.permute.xlu0 %999
        %1001 = vrot.lane.b32.xlu0 %v785, 127
        %v1002 = vpop.permute.xlu0 %1001
        %1003 = vrot.lane.b32.xlu0 %v788, 127
        %v1004 = vpop.permute.xlu0 %1003
        %1005 = vrot.lane.b32.xlu0 %v790, 127
        %v1006 = vpop.permute.xlu0 %1005
        %1007 = vrot.lane.b32.xlu0 %v793, 127
        %v1008 = vpop.permute.xlu0 %1007
        %1009 = vrot.lane.b32.xlu0 %v795, 127
        %v1010 = vpop.permute.xlu0 %1009
        %1011 = vrot.lane.b32.xlu0 %v798, 127
        %v1012 = vpop.permute.xlu0 %1011
        %1013 = vrot.lane.b32.xlu0 %v800, 127
        %v1014 = vpop.permute.xlu0 %1013
        %v1023 = vrot.slane %v1008, 4
        %v1024 = vsel %vm155, %v1023, %v1000
        %v1025 = vrot.slane %v1000, 4
        %v1026 = vsel %vm155, %v1008, %v1025
        %v1028 = vunpack.c.l.s4 1983009808
        %v1029 = vunpack.c.0.s8 %v1028
        %v1030 = vperm.slane %v1024, %v1029
        %v1032 = vunpack.c.l.s4 1983009808
        %v1033 = vunpack.c.0.s8 %v1032
        %v1034 = vperm.slane %v1026, %v1033
        %v1035 = vrot.slane %v1012, 4
        %v1036 = vsel %vm155, %v1035, %v1004
        %v1037 = vrot.slane %v1004, 4
        %v1038 = vsel %vm155, %v1012, %v1037
        %v1040 = vunpack.c.l.s4 1983009808
        %v1041 = vunpack.c.0.s8 %v1040
        %v1042 = vperm.slane %v1036, %v1041
        %v1044 = vunpack.c.l.s4 1983009808
        %v1045 = vunpack.c.0.s8 %v1044
        %v1046 = vperm.slane %v1038, %v1045
        %v1047 = vrot.slane %v1042, 4
        %v1048 = vsel %vm155, %v1047, %v1030
        %v1049 = vrot.slane %v1030, 4
        %v1050 = vsel %vm155, %v1042, %v1049
        %v1052 = vunpack.c.l.s4 1934713408
        %v1053 = vunpack.c.0.s8 %v1052
        %v1054 = vperm.slane %v1048, %v1053
        %v1056 = vunpack.c.l.s4 1934713408
        %v1057 = vunpack.c.0.s8 %v1056
        %v1058 = vperm.slane %v1050, %v1057
        %v1059 = vrot.slane %v1046, 4
        %v1060 = vsel %vm155, %v1059, %v1034
        %v1061 = vrot.slane %v1034, 4
        %v1062 = vsel %vm155, %v1046, %v1061
        %v1064 = vunpack.c.l.s4 1934713408
        %v1065 = vunpack.c.0.s8 %v1064
        %v1066 = vperm.slane %v1060, %v1065
        %v1068 = vunpack.c.l.s4 1934713408
        %v1069 = vunpack.c.0.s8 %v1068
        %v1070 = vperm.slane %v1062, %v1069
        %v1071 = vrot.slane %v1054, 4
        %v1072 = vsel %vm155, 0.0, %v1071
        %v1073 = vrot.slane %v1058, 4
        %v1074 = vsel %vm155, 0.0, %v1073
        %v1075 = vrot.slane %v1066, 4
        %v1076 = vsel %vm155, 0.0, %v1075
        %v1077 = vrot.slane %v1070, 4
        %v1078 = vsel %vm155, 0.0, %v1077
        %v1079 = vrot.slane %v1010, 4
        %v1080 = vsel %vm155, %v1079, %v1002
        %v1081 = vrot.slane %v1002, 4
        %v1082 = vsel %vm155, %v1010, %v1081
        %v1084 = vunpack.c.l.s4 1983009808
        %v1085 = vunpack.c.0.s8 %v1084
        %v1086 = vperm.slane %v1080, %v1085
        %v1088 = vunpack.c.l.s4 1983009808
        %v1089 = vunpack.c.0.s8 %v1088
        %v1090 = vperm.slane %v1082, %v1089
        %v1091 = vrot.slane %v1014, 4
        %v1092 = vsel %vm155, %v1091, %v1006
        %v1093 = vrot.slane %v1006, 4
        %v1094 = vsel %vm155, %v1014, %v1093
        %v1096 = vunpack.c.l.s4 1983009808
        %v1097 = vunpack.c.0.s8 %v1096
        %v1098 = vperm.slane %v1092, %v1097
        %v1100 = vunpack.c.l.s4 1983009808
        %v1101 = vunpack.c.0.s8 %v1100
        %v1102 = vperm.slane %v1094, %v1101
        %v1103 = vrot.slane %v1098, 4
        %v1104 = vsel %vm155, %v1103, %v1086
        %v1105 = vrot.slane %v1086, 4
        %v1106 = vsel %vm155, %v1098, %v1105
        %v1108 = vunpack.c.l.s4 1934713408
        %v1109 = vunpack.c.0.s8 %v1108
        %v1110 = vperm.slane %v1104, %v1109
        %v1112 = vunpack.c.l.s4 1934713408
        %v1113 = vunpack.c.0.s8 %v1112
        %v1114 = vperm.slane %v1106, %v1113
        %v1115 = vrot.slane %v1102, 4
        %v1116 = vsel %vm155, %v1115, %v1090
        %v1117 = vrot.slane %v1090, 4
        %v1118 = vsel %vm155, %v1102, %v1117
        %v1120 = vunpack.c.l.s4 1934713408
        %v1121 = vunpack.c.0.s8 %v1120
        %v1122 = vperm.slane %v1116, %v1121
        %v1124 = vunpack.c.l.s4 1934713408
        %v1125 = vunpack.c.0.s8 %v1124
        %v1126 = vperm.slane %v1118, %v1125
        %v1127 = vrot.slane %v1110, 4
        %v1128 = vsel %vm155, 0.0, %v1127
        %v1129 = vrot.slane %v1114, 4
        %v1130 = vsel %vm155, 0.0, %v1129
        %v1131 = vrot.slane %v1122, 4
        %v1132 = vsel %vm155, 0.0, %v1131
        %v1133 = vrot.slane %v1126, 4
        %v1134 = vsel %vm155, 0.0, %v1133
        %1136 = vrot.lane.b32.xlu0 %v1072, 16
        %v1137 = vpop.permute.xlu0 %1136
        %1140 = vrot.lane.b32.xlu0 %v1058, 32
        %v1141 = vpop.permute.xlu0 %1140
        %1144 = vrot.lane.b32.xlu0 %v1074, 48
        %v1145 = vpop.permute.xlu0 %1144
        %1148 = vrot.lane.b32.xlu0 %v1066, 64
        %v1149 = vpop.permute.xlu0 %1148
        %1152 = vrot.lane.b32.xlu0 %v1076, 80
        %v1153 = vpop.permute.xlu0 %1152
        %1156 = vrot.lane.b32.xlu0 %v1070, 96
        %v1157 = vpop.permute.xlu0 %1156
        %1160 = vrot.lane.b32.xlu0 %v1078, 112
        %v1161 = vpop.permute.xlu0 %1160
        %1164 = vrot.lane.b32.xlu0 %v1128, 16
        %v1165 = vpop.permute.xlu0 %1164
        %1168 = vrot.lane.b32.xlu0 %v1114, 32
        %v1169 = vpop.permute.xlu0 %1168
        %1172 = vrot.lane.b32.xlu0 %v1130, 48
        %v1173 = vpop.permute.xlu0 %1172
        %1176 = vrot.lane.b32.xlu0 %v1122, 64
        %v1177 = vpop.permute.xlu0 %1176
        %1180 = vrot.lane.b32.xlu0 %v1132, 80
        %v1181 = vpop.permute.xlu0 %1180
        %1184 = vrot.lane.b32.xlu0 %v1126, 96
        %v1185 = vpop.permute.xlu0 %1184
        %1188 = vrot.lane.b32.xlu0 %v1134, 112
        %v1189 = vpop.permute.xlu0 %1188
        %v1191 = vsel %vm323, %v1054, %v1137
        %v1192 = vsel %vm325, %v1191, %v1141
        %v1193 = vsel %vm327, %v1192, %v1145
        %v1194 = vsel %vm329, %v1193, %v1149
        %v1195 = vsel %vm331, %v1194, %v1153
        %v1196 = vsel %vm333, %v1195, %v1157
        %v1197 = vsel %vm335, %v1196, %v1161
        %v1198 = vsel %vm323, %v1110, %v1165
        %v1199 = vsel %vm325, %v1198, %v1169
        %v1200 = vsel %vm327, %v1199, %v1173
        %v1201 = vsel %vm329, %v1200, %v1177
        %v1202 = vsel %vm331, %v1201, %v1181
        %v1203 = vsel %vm333, %v1202, %v1185
        %v1204 = vsel %vm335, %v1203, %v1189
        %1205 = vst [vmem:[#allocation2 + $0x20] sm:$0xf] %v1197
        %1206 = vst [vmem:[#allocation2 + $0x28] sm:$0xf] %v1204
        %1207 = vrot.lane.b32.xlu0 %v783, 126
        %v1208 = vpop.permute.xlu0 %1207
        %1209 = vrot.lane.b32.xlu0 %v785, 126
        %v1210 = vpop.permute.xlu0 %1209
        %1211 = vrot.lane.b32.xlu0 %v788, 126
        %v1212 = vpop.permute.xlu0 %1211
        %1213 = vrot.lane.b32.xlu0 %v790, 126
        %v1214 = vpop.permute.xlu0 %1213
        %1215 = vrot.lane.b32.xlu0 %v793, 126
        %v1216 = vpop.permute.xlu0 %1215
        %1217 = vrot.lane.b32.xlu0 %v795, 126
        %v1218 = vpop.permute.xlu0 %1217
        %1219 = vrot.lane.b32.xlu0 %v798, 126
        %v1220 = vpop.permute.xlu0 %1219
        %1221 = vrot.lane.b32.xlu0 %v800, 126
        %v1222 = vpop.permute.xlu0 %1221
        %v1231 = vrot.slane %v1216, 4
        %v1232 = vsel %vm155, %v1231, %v1208
        %v1233 = vrot.slane %v1208, 4
        %v1234 = vsel %vm155, %v1216, %v1233
        %v1236 = vunpack.c.l.s4 1983009808
        %v1237 = vunpack.c.0.s8 %v1236
        %v1238 = vperm.slane %v1232, %v1237
        %v1240 = vunpack.c.l.s4 1983009808
        %v1241 = vunpack.c.0.s8 %v1240
        %v1242 = vperm.slane %v1234, %v1241
        %v1243 = vrot.slane %v1220, 4
        %v1244 = vsel %vm155, %v1243, %v1212
        %v1245 = vrot.slane %v1212, 4
        %v1246 = vsel %vm155, %v1220, %v1245
        %v1248 = vunpack.c.l.s4 1983009808
        %v1249 = vunpack.c.0.s8 %v1248
        %v1250 = vperm.slane %v1244, %v1249
        %v1252 = vunpack.c.l.s4 1983009808
        %v1253 = vunpack.c.0.s8 %v1252
        %v1254 = vperm.slane %v1246, %v1253
        %v1255 = vrot.slane %v1250, 4
        %v1256 = vsel %vm155, %v1255, %v1238
        %v1257 = vrot.slane %v1238, 4
        %v1258 = vsel %vm155, %v1250, %v1257
        %v1260 = vunpack.c.l.s4 1934713408
        %v1261 = vunpack.c.0.s8 %v1260
        %v1262 = vperm.slane %v1256, %v1261
        %v1264 = vunpack.c.l.s4 1934713408
        %v1265 = vunpack.c.0.s8 %v1264
        %v1266 = vperm.slane %v1258, %v1265
        %v1267 = vrot.slane %v1254, 4
        %v1268 = vsel %vm155, %v1267, %v1242
        %v1269 = vrot.slane %v1242, 4
        %v1270 = vsel %vm155, %v1254, %v1269
        %v1272 = vunpack.c.l.s4 1934713408
        %v1273 = vunpack.c.0.s8 %v1272
        %v1274 = vperm.slane %v1268, %v1273
        %v1276 = vunpack.c.l.s4 1934713408
        %v1277 = vunpack.c.0.s8 %v1276
        %v1278 = vperm.slane %v1270, %v1277
        %v1279 = vrot.slane %v1262, 4
        %v1280 = vsel %vm155, 0.0, %v1279
        %v1281 = vrot.slane %v1266, 4
        %v1282 = vsel %vm155, 0.0, %v1281
        %v1283 = vrot.slane %v1274, 4
        %v1284 = vsel %vm155, 0.0, %v1283
        %v1285 = vrot.slane %v1278, 4
        %v1286 = vsel %vm155, 0.0, %v1285
        %v1287 = vrot.slane %v1218, 4
        %v1288 = vsel %vm155, %v1287, %v1210
        %v1289 = vrot.slane %v1210, 4
        %v1290 = vsel %vm155, %v1218, %v1289
        %v1292 = vunpack.c.l.s4 1983009808
        %v1293 = vunpack.c.0.s8 %v1292
        %v1294 = vperm.slane %v1288, %v1293
        %v1296 = vunpack.c.l.s4 1983009808
        %v1297 = vunpack.c.0.s8 %v1296
        %v1298 = vperm.slane %v1290, %v1297
        %v1299 = vrot.slane %v1222, 4
        %v1300 = vsel %vm155, %v1299, %v1214
        %v1301 = vrot.slane %v1214, 4
        %v1302 = vsel %vm155, %v1222, %v1301
        %v1304 = vunpack.c.l.s4 1983009808
        %v1305 = vunpack.c.0.s8 %v1304
        %v1306 = vperm.slane %v1300, %v1305
        %v1308 = vunpack.c.l.s4 1983009808
        %v1309 = vunpack.c.0.s8 %v1308
        %v1310 = vperm.slane %v1302, %v1309
        %v1311 = vrot.slane %v1306, 4
        %v1312 = vsel %vm155, %v1311, %v1294
        %v1313 = vrot.slane %v1294, 4
        %v1314 = vsel %vm155, %v1306, %v1313
        %v1316 = vunpack.c.l.s4 1934713408
        %v1317 = vunpack.c.0.s8 %v1316
        %v1318 = vperm.slane %v1312, %v1317
        %v1320 = vunpack.c.l.s4 1934713408
        %v1321 = vunpack.c.0.s8 %v1320
        %v1322 = vperm.slane %v1314, %v1321
        %v1323 = vrot.slane %v1310, 4
        %v1324 = vsel %vm155, %v1323, %v1298
        %v1325 = vrot.slane %v1298, 4
        %v1326 = vsel %vm155, %v1310, %v1325
        %v1328 = vunpack.c.l.s4 1934713408
        %v1329 = vunpack.c.0.s8 %v1328
        %v1330 = vperm.slane %v1324, %v1329
        %v1332 = vunpack.c.l.s4 1934713408
        %v1333 = vunpack.c.0.s8 %v1332
        %v1334 = vperm.slane %v1326, %v1333
        %v1335 = vrot.slane %v1318, 4
        %v1336 = vsel %vm155, 0.0, %v1335
        %v1337 = vrot.slane %v1322, 4
        %v1338 = vsel %vm155, 0.0, %v1337
        %v1339 = vrot.slane %v1330, 4
        %v1340 = vsel %vm155, 0.0, %v1339
        %v1341 = vrot.slane %v1334, 4
        %v1342 = vsel %vm155, 0.0, %v1341
        %1344 = vrot.lane.b32.xlu0 %v1280, 16
        %v1345 = vpop.permute.xlu0 %1344
        %1348 = vrot.lane.b32.xlu0 %v1266, 32
        %v1349 = vpop.permute.xlu0 %1348
        %1352 = vrot.lane.b32.xlu0 %v1282, 48
        %v1353 = vpop.permute.xlu0 %1352
        %1356 = vrot.lane.b32.xlu0 %v1274, 64
        %v1357 = vpop.permute.xlu0 %1356
        %1360 = vrot.lane.b32.xlu0 %v1284, 80
        %v1361 = vpop.permute.xlu0 %1360
        %1364 = vrot.lane.b32.xlu0 %v1278, 96
        %v1365 = vpop.permute.xlu0 %1364
        %1368 = vrot.lane.b32.xlu0 %v1286, 112
        %v1369 = vpop.permute.xlu0 %1368
        %1372 = vrot.lane.b32.xlu0 %v1336, 16
        %v1373 = vpop.permute.xlu0 %1372
        %1376 = vrot.lane.b32.xlu0 %v1322, 32
        %v1377 = vpop.permute.xlu0 %1376
        %1380 = vrot.lane.b32.xlu0 %v1338, 48
        %v1381 = vpop.permute.xlu0 %1380
        %1384 = vrot.lane.b32.xlu0 %v1330, 64
        %v1385 = vpop.permute.xlu0 %1384
        %1388 = vrot.lane.b32.xlu0 %v1340, 80
        %v1389 = vpop.permute.xlu0 %1388
        %1392 = vrot.lane.b32.xlu0 %v1334, 96
        %v1393 = vpop.permute.xlu0 %1392
        %1396 = vrot.lane.b32.xlu0 %v1342, 112
        %v1397 = vpop.permute.xlu0 %1396
        %v1399 = vsel %vm323, %v1262, %v1345
        %v1400 = vsel %vm325, %v1399, %v1349
        %v1401 = vsel %vm327, %v1400, %v1353
        %v1402 = vsel %vm329, %v1401, %v1357
        %v1403 = vsel %vm331, %v1402, %v1361
        %v1404 = vsel %vm333, %v1403, %v1365
        %v1405 = vsel %vm335, %v1404, %v1369
        %v1406 = vsel %vm323, %v1318, %v1373
        %v1407 = vsel %vm325, %v1406, %v1377
        %v1408 = vsel %vm327, %v1407, %v1381
        %v1409 = vsel %vm329, %v1408, %v1385
        %v1410 = vsel %vm331, %v1409, %v1389
        %v1411 = vsel %vm333, %v1410, %v1393
        %v1412 = vsel %vm335, %v1411, %v1397
        %v1415 = vrot.slane %v1405, 4
        %v1416 = vrot.slane %v1412, 4
        %1419 = vst [vmem:[#allocation2 + $0x20] sm:$0xf0] %v1415
        %1420 = vst [vmem:[#allocation2 + $0x28] sm:$0xf0] %v1416
        %vm1421 = vcmask 1045504
        %v1422 = vrot.slane %v142, 2
        %v1423 = vrot.slane %v143, 2
        %v1424 = vsel %vm1421, %v1422, %v1423
        %v1425 = vrot.slane %v144, 2
        %v1426 = vsel %vm1421, %v1423, %v1425
        %v1427 = vrot.slane %v145, 2
        %v1428 = vrot.slane %v146, 2
        %v1429 = vsel %vm1421, %v1427, %v1428
        %v1430 = vrot.slane %v147, 2
        %v1431 = vsel %vm1421, %v1428, %v1430
        %v1432 = vrot.slane %v148, 2
        %v1433 = vrot.slane %v149, 2
        %v1434 = vsel %vm1421, %v1432, %v1433
        %v1435 = vrot.slane %v150, 2
        %v1436 = vsel %vm1421, %v1433, %v1435
        %v1437 = vrot.slane %v151, 2
        %v1438 = vrot.slane %v152, 2
        %v1439 = vsel %vm1421, %v1437, %v1438
        %v1440 = vrot.slane %v153, 2
        %v1441 = vsel %vm1421, %v1438, %v1440
        %v1450 = vrot.slane %v1434, 4
        %v1451 = vsel %vm155, %v1450, %v1424
        %v1452 = vrot.slane %v1424, 4
        %v1453 = vsel %vm155, %v1434, %v1452
        %v1455 = vunpack.c.l.s4 1983009808
        %v1456 = vunpack.c.0.s8 %v1455
        %v1457 = vperm.slane %v1451, %v1456
        %v1459 = vunpack.c.l.s4 1983009808
        %v1460 = vunpack.c.0.s8 %v1459
        %v1461 = vperm.slane %v1453, %v1460
        %v1462 = vrot.slane %v1439, 4
        %v1463 = vsel %vm155, %v1462, %v1429
        %v1464 = vrot.slane %v1429, 4
        %v1465 = vsel %vm155, %v1439, %v1464
        %v1467 = vunpack.c.l.s4 1983009808
        %v1468 = vunpack.c.0.s8 %v1467
        %v1469 = vperm.slane %v1463, %v1468
        %v1471 = vunpack.c.l.s4 1983009808
        %v1472 = vunpack.c.0.s8 %v1471
        %v1473 = vperm.slane %v1465, %v1472
        %v1474 = vrot.slane %v1469, 4
        %v1475 = vsel %vm155, %v1474, %v1457
        %v1476 = vrot.slane %v1457, 4
        %v1477 = vsel %vm155, %v1469, %v1476
        %v1479 = vunpack.c.l.s4 1934713408
        %v1480 = vunpack.c.0.s8 %v1479
        %v1481 = vperm.slane %v1475, %v1480
        %v1483 = vunpack.c.l.s4 1934713408
        %v1484 = vunpack.c.0.s8 %v1483
        %v1485 = vperm.slane %v1477, %v1484
        %v1486 = vrot.slane %v1473, 4
        %v1487 = vsel %vm155, %v1486, %v1461
        %v1488 = vrot.slane %v1461, 4
        %v1489 = vsel %vm155, %v1473, %v1488
        %v1491 = vunpack.c.l.s4 1934713408
        %v1492 = vunpack.c.0.s8 %v1491
        %v1493 = vperm.slane %v1487, %v1492
        %v1495 = vunpack.c.l.s4 1934713408
        %v1496 = vunpack.c.0.s8 %v1495
        %v1497 = vperm.slane %v1489, %v1496
        %v1498 = vrot.slane %v1481, 4
        %v1499 = vsel %vm155, 0.0, %v1498
        %v1500 = vrot.slane %v1485, 4
        %v1501 = vsel %vm155, 0.0, %v1500
        %v1502 = vrot.slane %v1493, 4
        %v1503 = vsel %vm155, 0.0, %v1502
        %v1504 = vrot.slane %v1497, 4
        %v1505 = vsel %vm155, 0.0, %v1504
        %v1506 = vrot.slane %v1436, 4
        %v1507 = vsel %vm155, %v1506, %v1426
        %v1508 = vrot.slane %v1426, 4
        %v1509 = vsel %vm155, %v1436, %v1508
        %v1511 = vunpack.c.l.s4 1983009808
        %v1512 = vunpack.c.0.s8 %v1511
        %v1513 = vperm.slane %v1507, %v1512
        %v1515 = vunpack.c.l.s4 1983009808
        %v1516 = vunpack.c.0.s8 %v1515
        %v1517 = vperm.slane %v1509, %v1516
        %v1518 = vrot.slane %v1441, 4
        %v1519 = vsel %vm155, %v1518, %v1431
        %v1520 = vrot.slane %v1431, 4
        %v1521 = vsel %vm155, %v1441, %v1520
        %v1523 = vunpack.c.l.s4 1983009808
        %v1524 = vunpack.c.0.s8 %v1523
        %v1525 = vperm.slane %v1519, %v1524
        %v1527 = vunpack.c.l.s4 1983009808
        %v1528 = vunpack.c.0.s8 %v1527
        %v1529 = vperm.slane %v1521, %v1528
        %v1530 = vrot.slane %v1525, 4
        %v1531 = vsel %vm155, %v1530, %v1513
        %v1532 = vrot.slane %v1513, 4
        %v1533 = vsel %vm155, %v1525, %v1532
        %v1535 = vunpack.c.l.s4 1934713408
        %v1536 = vunpack.c.0.s8 %v1535
        %v1537 = vperm.slane %v1531, %v1536
        %v1539 = vunpack.c.l.s4 1934713408
        %v1540 = vunpack.c.0.s8 %v1539
        %v1541 = vperm.slane %v1533, %v1540
        %v1542 = vrot.slane %v1529, 4
        %v1543 = vsel %vm155, %v1542, %v1517
        %v1544 = vrot.slane %v1517, 4
        %v1545 = vsel %vm155, %v1529, %v1544
        %v1547 = vunpack.c.l.s4 1934713408
        %v1548 = vunpack.c.0.s8 %v1547
        %v1549 = vperm.slane %v1543, %v1548
        %v1551 = vunpack.c.l.s4 1934713408
        %v1552 = vunpack.c.0.s8 %v1551
        %v1553 = vperm.slane %v1545, %v1552
        %v1554 = vrot.slane %v1537, 4
        %v1555 = vsel %vm155, 0.0, %v1554
        %v1556 = vrot.slane %v1541, 4
        %v1557 = vsel %vm155, 0.0, %v1556
        %v1558 = vrot.slane %v1549, 4
        %v1559 = vsel %vm155, 0.0, %v1558
        %v1560 = vrot.slane %v1553, 4
        %v1561 = vsel %vm155, 0.0, %v1560
        %1563 = vrot.lane.b32.xlu0 %v1499, 16
        %v1564 = vpop.permute.xlu0 %1563
        %1567 = vrot.lane.b32.xlu0 %v1485, 32
        %v1568 = vpop.permute.xlu0 %1567
        %1571 = vrot.lane.b32.xlu0 %v1501, 48
        %v1572 = vpop.permute.xlu0 %1571
        %1575 = vrot.lane.b32.xlu0 %v1493, 64
        %v1576 = vpop.permute.xlu0 %1575
        %1579 = vrot.lane.b32.xlu0 %v1503, 80
        %v1580 = vpop.permute.xlu0 %1579
        %1583 = vrot.lane.b32.xlu0 %v1497, 96
        %v1584 = vpop.permute.xlu0 %1583
        %1587 = vrot.lane.b32.xlu0 %v1505, 112
        %v1588 = vpop.permute.xlu0 %1587
        %1591 = vrot.lane.b32.xlu0 %v1555, 16
        %v1592 = vpop.permute.xlu0 %1591
        %1595 = vrot.lane.b32.xlu0 %v1541, 32
        %v1596 = vpop.permute.xlu0 %1595
        %1599 = vrot.lane.b32.xlu0 %v1557, 48
        %v1600 = vpop.permute.xlu0 %1599
        %1603 = vrot.lane.b32.xlu0 %v1549, 64
        %v1604 = vpop.permute.xlu0 %1603
        %1607 = vrot.lane.b32.xlu0 %v1559, 80
        %v1608 = vpop.permute.xlu0 %1607
        %1611 = vrot.lane.b32.xlu0 %v1553, 96
        %v1612 = vpop.permute.xlu0 %1611
        %1615 = vrot.lane.b32.xlu0 %v1561, 112
        %v1616 = vpop.permute.xlu0 %1615
        %v1618 = vsel %vm323, %v1481, %v1564
        %v1619 = vsel %vm325, %v1618, %v1568
        %v1620 = vsel %vm327, %v1619, %v1572
        %v1621 = vsel %vm329, %v1620, %v1576
        %v1622 = vsel %vm331, %v1621, %v1580
        %v1623 = vsel %vm333, %v1622, %v1584
        %v1624 = vsel %vm335, %v1623, %v1588
        %v1625 = vsel %vm323, %v1537, %v1592
        %v1626 = vsel %vm325, %v1625, %v1596
        %v1627 = vsel %vm327, %v1626, %v1600
        %v1628 = vsel %vm329, %v1627, %v1604
        %v1629 = vsel %vm331, %v1628, %v1608
        %v1630 = vsel %vm333, %v1629, %v1612
        %v1631 = vsel %vm335, %v1630, %v1616
        %1632 = vst [vmem:[#allocation2 + $0x30] sm:$0xf] %v1624
        %1633 = vst [vmem:[#allocation2 + $0x38] sm:$0xf] %v1631
        %1634 = vrot.lane.b32.xlu0 %v1424, 127
        %v1635 = vpop.permute.xlu0 %1634
        %1636 = vrot.lane.b32.xlu0 %v1426, 127
        %v1637 = vpop.permute.xlu0 %1636
        %1638 = vrot.lane.b32.xlu0 %v1429, 127
        %v1639 = vpop.permute.xlu0 %1638
        %1640 = vrot.lane.b32.xlu0 %v1431, 127
        %v1641 = vpop.permute.xlu0 %1640
        %1642 = vrot.lane.b32.xlu0 %v1434, 127
        %v1643 = vpop.permute.xlu0 %1642
        %1644 = vrot.lane.b32.xlu0 %v1436, 127
        %v1645 = vpop.permute.xlu0 %1644
        %1646 = vrot.lane.b32.xlu0 %v1439, 127
        %v1647 = vpop.permute.xlu0 %1646
        %1648 = vrot.lane.b32.xlu0 %v1441, 127
        %v1649 = vpop.permute.xlu0 %1648
        %v1658 = vrot.slane %v1643, 4
        %v1659 = vsel %vm155, %v1658, %v1635
        %v1660 = vrot.slane %v1635, 4
        %v1661 = vsel %vm155, %v1643, %v1660
        %v1663 = vunpack.c.l.s4 1983009808
        %v1664 = vunpack.c.0.s8 %v1663
        %v1665 = vperm.slane %v1659, %v1664
        %v1667 = vunpack.c.l.s4 1983009808
        %v1668 = vunpack.c.0.s8 %v1667
        %v1669 = vperm.slane %v1661, %v1668
        %v1670 = vrot.slane %v1647, 4
        %v1671 = vsel %vm155, %v1670, %v1639
        %v1672 = vrot.slane %v1639, 4
        %v1673 = vsel %vm155, %v1647, %v1672
        %v1675 = vunpack.c.l.s4 1983009808
        %v1676 = vunpack.c.0.s8 %v1675
        %v1677 = vperm.slane %v1671, %v1676
        %v1679 = vunpack.c.l.s4 1983009808
        %v1680 = vunpack.c.0.s8 %v1679
        %v1681 = vperm.slane %v1673, %v1680
        %v1682 = vrot.slane %v1677, 4
        %v1683 = vsel %vm155, %v1682, %v1665
        %v1684 = vrot.slane %v1665, 4
        %v1685 = vsel %vm155, %v1677, %v1684
        %v1687 = vunpack.c.l.s4 1934713408
        %v1688 = vunpack.c.0.s8 %v1687
        %v1689 = vperm.slane %v1683, %v1688
        %v1691 = vunpack.c.l.s4 1934713408
        %v1692 = vunpack.c.0.s8 %v1691
        %v1693 = vperm.slane %v1685, %v1692
        %v1694 = vrot.slane %v1681, 4
        %v1695 = vsel %vm155, %v1694, %v1669
        %v1696 = vrot.slane %v1669, 4
        %v1697 = vsel %vm155, %v1681, %v1696
        %v1699 = vunpack.c.l.s4 1934713408
        %v1700 = vunpack.c.0.s8 %v1699
        %v1701 = vperm.slane %v1695, %v1700
        %v1703 = vunpack.c.l.s4 1934713408
        %v1704 = vunpack.c.0.s8 %v1703
        %v1705 = vperm.slane %v1697, %v1704
        %v1706 = vrot.slane %v1689, 4
        %v1707 = vsel %vm155, 0.0, %v1706
        %v1708 = vrot.slane %v1693, 4
        %v1709 = vsel %vm155, 0.0, %v1708
        %v1710 = vrot.slane %v1701, 4
        %v1711 = vsel %vm155, 0.0, %v1710
        %v1712 = vrot.slane %v1705, 4
        %v1713 = vsel %vm155, 0.0, %v1712
        %v1714 = vrot.slane %v1645, 4
        %v1715 = vsel %vm155, %v1714, %v1637
        %v1716 = vrot.slane %v1637, 4
        %v1717 = vsel %vm155, %v1645, %v1716
        %v1719 = vunpack.c.l.s4 1983009808
        %v1720 = vunpack.c.0.s8 %v1719
        %v1721 = vperm.slane %v1715, %v1720
        %v1723 = vunpack.c.l.s4 1983009808
        %v1724 = vunpack.c.0.s8 %v1723
        %v1725 = vperm.slane %v1717, %v1724
        %v1726 = vrot.slane %v1649, 4
        %v1727 = vsel %vm155, %v1726, %v1641
        %v1728 = vrot.slane %v1641, 4
        %v1729 = vsel %vm155, %v1649, %v1728
        %v1731 = vunpack.c.l.s4 1983009808
        %v1732 = vunpack.c.0.s8 %v1731
        %v1733 = vperm.slane %v1727, %v1732
        %v1735 = vunpack.c.l.s4 1983009808
        %v1736 = vunpack.c.0.s8 %v1735
        %v1737 = vperm.slane %v1729, %v1736
        %v1738 = vrot.slane %v1733, 4
        %v1739 = vsel %vm155, %v1738, %v1721
        %v1740 = vrot.slane %v1721, 4
        %v1741 = vsel %vm155, %v1733, %v1740
        %v1743 = vunpack.c.l.s4 1934713408
        %v1744 = vunpack.c.0.s8 %v1743
        %v1745 = vperm.slane %v1739, %v1744
        %v1747 = vunpack.c.l.s4 1934713408
        %v1748 = vunpack.c.0.s8 %v1747
        %v1749 = vperm.slane %v1741, %v1748
        %v1750 = vrot.slane %v1737, 4
        %v1751 = vsel %vm155, %v1750, %v1725
        %v1752 = vrot.slane %v1725, 4
        %v1753 = vsel %vm155, %v1737, %v1752
        %v1755 = vunpack.c.l.s4 1934713408
        %v1756 = vunpack.c.0.s8 %v1755
        %v1757 = vperm.slane %v1751, %v1756
        %v1759 = vunpack.c.l.s4 1934713408
        %v1760 = vunpack.c.0.s8 %v1759
        %v1761 = vperm.slane %v1753, %v1760
        %v1762 = vrot.slane %v1745, 4
        %v1763 = vsel %vm155, 0.0, %v1762
        %v1764 = vrot.slane %v1749, 4
        %v1765 = vsel %vm155, 0.0, %v1764
        %v1766 = vrot.slane %v1757, 4
        %v1767 = vsel %vm155, 0.0, %v1766
        %v1768 = vrot.slane %v1761, 4
        %v1769 = vsel %vm155, 0.0, %v1768
        %1771 = vrot.lane.b32.xlu0 %v1707, 16
        %v1772 = vpop.permute.xlu0 %1771
        %1775 = vrot.lane.b32.xlu0 %v1693, 32
        %v1776 = vpop.permute.xlu0 %1775
        %1779 = vrot.lane.b32.xlu0 %v1709, 48
        %v1780 = vpop.permute.xlu0 %1779
        %1783 = vrot.lane.b32.xlu0 %v1701, 64
        %v1784 = vpop.permute.xlu0 %1783
        %1787 = vrot.lane.b32.xlu0 %v1711, 80
        %v1788 = vpop.permute.xlu0 %1787
        %1791 = vrot.lane.b32.xlu0 %v1705, 96
        %v1792 = vpop.permute.xlu0 %1791
        %1795 = vrot.lane.b32.xlu0 %v1713, 112
        %v1796 = vpop.permute.xlu0 %1795
        %1799 = vrot.lane.b32.xlu0 %v1763, 16
        %v1800 = vpop.permute.xlu0 %1799
        %1803 = vrot.lane.b32.xlu0 %v1749, 32
        %v1804 = vpop.permute.xlu0 %1803
        %1807 = vrot.lane.b32.xlu0 %v1765, 48
        %v1808 = vpop.permute.xlu0 %1807
        %1811 = vrot.lane.b32.xlu0 %v1757, 64
        %v1812 = vpop.permute.xlu0 %1811
        %1815 = vrot.lane.b32.xlu0 %v1767, 80
        %v1816 = vpop.permute.xlu0 %1815
        %1819 = vrot.lane.b32.xlu0 %v1761, 96
        %v1820 = vpop.permute.xlu0 %1819
        %1823 = vrot.lane.b32.xlu0 %v1769, 112
        %v1824 = vpop.permute.xlu0 %1823
        %v1826 = vsel %vm323, %v1689, %v1772
        %v1827 = vsel %vm325, %v1826, %v1776
        %v1828 = vsel %vm327, %v1827, %v1780
        %v1829 = vsel %vm329, %v1828, %v1784
        %v1830 = vsel %vm331, %v1829, %v1788
        %v1831 = vsel %vm333, %v1830, %v1792
        %v1832 = vsel %vm335, %v1831, %v1796
        %v1833 = vsel %vm323, %v1745, %v1800
        %v1834 = vsel %vm325, %v1833, %v1804
        %v1835 = vsel %vm327, %v1834, %v1808
        %v1836 = vsel %vm329, %v1835, %v1812
        %v1837 = vsel %vm331, %v1836, %v1816
        %v1838 = vsel %vm333, %v1837, %v1820
        %v1839 = vsel %vm335, %v1838, %v1824
        %v1842 = vrot.slane %v1832, 4
        %v1843 = vrot.slane %v1839, 4
        %1846 = vst [vmem:[#allocation2 + $0x30] sm:$0xf0] %v1842
        %1847 = vst [vmem:[#allocation2 + $0x38] sm:$0xf0] %v1843
        %1848 = vrot.lane.b32.xlu0 %v1424, 126
        %v1849 = vpop.permute.xlu0 %1848
        %1850 = vrot.lane.b32.xlu0 %v1426, 126
        %v1851 = vpop.permute.xlu0 %1850
        %1852 = vrot.lane.b32.xlu0 %v1429, 126
        %v1853 = vpop.permute.xlu0 %1852
        %1854 = vrot.lane.b32.xlu0 %v1431, 126
        %v1855 = vpop.permute.xlu0 %1854
        %1856 = vrot.lane.b32.xlu0 %v1434, 126
        %v1857 = vpop.permute.xlu0 %1856
        %1858 = vrot.lane.b32.xlu0 %v1436, 126
        %v1859 = vpop.permute.xlu0 %1858
        %1860 = vrot.lane.b32.xlu0 %v1439, 126
        %v1861 = vpop.permute.xlu0 %1860
        %1862 = vrot.lane.b32.xlu0 %v1441, 126
        %v1863 = vpop.permute.xlu0 %1862
        %v1872 = vrot.slane %v1857, 4
        %v1873 = vsel %vm155, %v1872, %v1849
        %v1874 = vrot.slane %v1849, 4
        %v1875 = vsel %vm155, %v1857, %v1874
        %v1877 = vunpack.c.l.s4 1983009808
        %v1878 = vunpack.c.0.s8 %v1877
        %v1879 = vperm.slane %v1873, %v1878
        %v1881 = vunpack.c.l.s4 1983009808
        %v1882 = vunpack.c.0.s8 %v1881
        %v1883 = vperm.slane %v1875, %v1882
        %v1884 = vrot.slane %v1861, 4
        %v1885 = vsel %vm155, %v1884, %v1853
        %v1886 = vrot.slane %v1853, 4
        %v1887 = vsel %vm155, %v1861, %v1886
        %v1889 = vunpack.c.l.s4 1983009808
        %v1890 = vunpack.c.0.s8 %v1889
        %v1891 = vperm.slane %v1885, %v1890
        %v1893 = vunpack.c.l.s4 1983009808
        %v1894 = vunpack.c.0.s8 %v1893
        %v1895 = vperm.slane %v1887, %v1894
        %v1896 = vrot.slane %v1891, 4
        %v1897 = vsel %vm155, %v1896, %v1879
        %v1898 = vrot.slane %v1879, 4
        %v1899 = vsel %vm155, %v1891, %v1898
        %v1901 = vunpack.c.l.s4 1934713408
        %v1902 = vunpack.c.0.s8 %v1901
        %v1903 = vperm.slane %v1897, %v1902
        %v1905 = vunpack.c.l.s4 1934713408
        %v1906 = vunpack.c.0.s8 %v1905
        %v1907 = vperm.slane %v1899, %v1906
        %v1908 = vrot.slane %v1895, 4
        %v1909 = vsel %vm155, %v1908, %v1883
        %v1910 = vrot.slane %v1883, 4
        %v1911 = vsel %vm155, %v1895, %v1910
        %v1913 = vunpack.c.l.s4 1934713408
        %v1914 = vunpack.c.0.s8 %v1913
        %v1915 = vperm.slane %v1909, %v1914
        %v1917 = vunpack.c.l.s4 1934713408
        %v1918 = vunpack.c.0.s8 %v1917
        %v1919 = vperm.slane %v1911, %v1918
        %v1920 = vrot.slane %v1903, 4
        %v1921 = vsel %vm155, 0.0, %v1920
        %v1922 = vrot.slane %v1907, 4
        %v1923 = vsel %vm155, 0.0, %v1922
        %v1924 = vrot.slane %v1915, 4
        %v1925 = vsel %vm155, 0.0, %v1924
        %v1926 = vrot.slane %v1919, 4
        %v1927 = vsel %vm155, 0.0, %v1926
        %v1928 = vrot.slane %v1859, 4
        %v1929 = vsel %vm155, %v1928, %v1851
        %v1930 = vrot.slane %v1851, 4
        %v1931 = vsel %vm155, %v1859, %v1930
        %v1933 = vunpack.c.l.s4 1983009808
        %v1934 = vunpack.c.0.s8 %v1933
        %v1935 = vperm.slane %v1929, %v1934
        %v1937 = vunpack.c.l.s4 1983009808
        %v1938 = vunpack.c.0.s8 %v1937
        %v1939 = vperm.slane %v1931, %v1938
        %v1940 = vrot.slane %v1863, 4
        %v1941 = vsel %vm155, %v1940, %v1855
        %v1942 = vrot.slane %v1855, 4
        %v1943 = vsel %vm155, %v1863, %v1942
        %v1945 = vunpack.c.l.s4 1983009808
        %v1946 = vunpack.c.0.s8 %v1945
        %v1947 = vperm.slane %v1941, %v1946
        %v1949 = vunpack.c.l.s4 1983009808
        %v1950 = vunpack.c.0.s8 %v1949
        %v1951 = vperm.slane %v1943, %v1950
        %v1952 = vrot.slane %v1947, 4
        %v1953 = vsel %vm155, %v1952, %v1935
        %v1954 = vrot.slane %v1935, 4
        %v1955 = vsel %vm155, %v1947, %v1954
        %v1957 = vunpack.c.l.s4 1934713408
        %v1958 = vunpack.c.0.s8 %v1957
        %v1959 = vperm.slane %v1953, %v1958
        %v1961 = vunpack.c.l.s4 1934713408
        %v1962 = vunpack.c.0.s8 %v1961
        %v1963 = vperm.slane %v1955, %v1962
        %v1964 = vrot.slane %v1951, 4
        %v1965 = vsel %vm155, %v1964, %v1939
        %v1966 = vrot.slane %v1939, 4
        %v1967 = vsel %vm155, %v1951, %v1966
        %v1969 = vunpack.c.l.s4 1934713408
        %v1970 = vunpack.c.0.s8 %v1969
        %v1971 = vperm.slane %v1965, %v1970
        %v1973 = vunpack.c.l.s4 1934713408
        %v1974 = vunpack.c.0.s8 %v1973
        %v1975 = vperm.slane %v1967, %v1974
        %v1976 = vrot.slane %v1959, 4
        %v1977 = vsel %vm155, 0.0, %v1976
        %v1978 = vrot.slane %v1963, 4
        %v1979 = vsel %vm155, 0.0, %v1978
        %v1980 = vrot.slane %v1971, 4
        %v1981 = vsel %vm155, 0.0, %v1980
        %v1982 = vrot.slane %v1975, 4
        %v1983 = vsel %vm155, 0.0, %v1982
        %1985 = vrot.lane.b32.xlu0 %v1921, 16
        %v1986 = vpop.permute.xlu0 %1985
        %1989 = vrot.lane.b32.xlu0 %v1907, 32
        %v1990 = vpop.permute.xlu0 %1989
        %1993 = vrot.lane.b32.xlu0 %v1923, 48
        %v1994 = vpop.permute.xlu0 %1993
        %1997 = vrot.lane.b32.xlu0 %v1915, 64
        %v1998 = vpop.permute.xlu0 %1997
        %2001 = vrot.lane.b32.xlu0 %v1925, 80
        %v2002 = vpop.permute.xlu0 %2001
        %2005 = vrot.lane.b32.xlu0 %v1919, 96
        %v2006 = vpop.permute.xlu0 %2005
        %2009 = vrot.lane.b32.xlu0 %v1927, 112
        %v2010 = vpop.permute.xlu0 %2009
        %2013 = vrot.lane.b32.xlu0 %v1977, 16
        %v2014 = vpop.permute.xlu0 %2013
        %2017 = vrot.lane.b32.xlu0 %v1963, 32
        %v2018 = vpop.permute.xlu0 %2017
        %2021 = vrot.lane.b32.xlu0 %v1979, 48
        %v2022 = vpop.permute.xlu0 %2021
        %2025 = vrot.lane.b32.xlu0 %v1971, 64
        %v2026 = vpop.permute.xlu0 %2025
        %2029 = vrot.lane.b32.xlu0 %v1981, 80
        %v2030 = vpop.permute.xlu0 %2029
        %2033 = vrot.lane.b32.xlu0 %v1975, 96
        %v2034 = vpop.permute.xlu0 %2033
        %2037 = vrot.lane.b32.xlu0 %v1983, 112
        %v2038 = vpop.permute.xlu0 %2037
        %v2040 = vsel %vm323, %v1903, %v1986
        %v2041 = vsel %vm325, %v2040, %v1990
        %v2042 = vsel %vm327, %v2041, %v1994
        %v2043 = vsel %vm329, %v2042, %v1998
        %v2044 = vsel %vm331, %v2043, %v2002
        %v2045 = vsel %vm333, %v2044, %v2006
        %v2046 = vsel %vm335, %v2045, %v2010
        %v2047 = vsel %vm323, %v1959, %v2014
        %v2048 = vsel %vm325, %v2047, %v2018
        %v2049 = vsel %vm327, %v2048, %v2022
        %v2050 = vsel %vm329, %v2049, %v2026
        %v2051 = vsel %vm331, %v2050, %v2030
        %v2052 = vsel %vm333, %v2051, %v2034
        %v2053 = vsel %vm335, %v2052, %v2038
        %2054 = vst [vmem:[#allocation2 + $0x40] sm:$0xf] %v2046
        %2055 = vst [vmem:[#allocation2 + $0x48] sm:$0xf] %v2053
        %v2056 = vld [vmem:[%s1] sm:$0xff]
        %v2057 = vld [vmem:[#allocation2] sm:$0xff]
        %v2058 = vld [vmem:[#allocation2 + $0x8] sm:$0xff]
        %v2059 = vld [vmem:[#allocation2 + $0x10] sm:$0xff]
        %v2060 = vld [vmem:[#allocation2 + $0x18] sm:$0xff]
        %v2061 = vld [vmem:[#allocation2 + $0x20] sm:$0xff]
        %v2062 = vld [vmem:[#allocation2 + $0x28] sm:$0xff]
        %v2063 = vld [vmem:[#allocation2 + $0x30] sm:$0xff]
        %v2064 = vld [vmem:[#allocation2 + $0x38] sm:$0xff]
        %v2065 = vld [vmem:[#allocation2 + $0x40] sm:$0xf]
        %v2066 = vld [vmem:[#allocation2 + $0x48] sm:$0xf]
        %vm2067 = vcmask 293888
        %v2069 = vsel %vm2067, %v2056, 0
        %vm2071 = vcmask 1043456
        %v2073 = vsel %vm2071, %v2065, 0
        %v2076 = vsel %vm2071, %v2066, 0
        %2078 = vmatpush.msra.mxu0 0.0
        %2079 = vmatpush.msra.mxu0 0.0
        %2080 = vmatpush.msra.mxu0 0.0
        %2081 = vmatpush.msra.mxu0 0.0
        %2082 = vmatpush.msra.mxu0 0.0
        %2083 = vmatpush.msra.mxu0 0.0
        %2084 = vmatpush.msra.mxu0 0.0
        %2085 = vmatpush.msra.mxu0 0.0
        %2086 = vmatpush.msra.mxu0 0.0
        %2087 = vmatpush.msra.mxu0 0.0
        %2088 = vmatpush.msra.mxu0 0.0
        %2089 = vmatpush.msra.mxu0 %v2073
        %2090 = vmatpush.msra.mxu0 %v2063
        %2091 = vmatpush.msra.mxu0 %v2061
        %2092 = vmatpush.msra.mxu0 %v2059
        %2093 = vmatpush.msra.mxu0 %v2057
        %2094 = vmatmul.f32.gmra.mxu0 %v2069
        %v2095 = vpop.f32.mrf.mxu0
        %v2096 = vadd.f32 0.0, %v2095
        %2097 = vdwg.mxu0
        %2098 = vmatpush.msra.mxu0 0.0
        %2099 = vmatpush.msra.mxu0 0.0
        %2100 = vmatpush.msra.mxu0 0.0
        %2101 = vmatpush.msra.mxu0 0.0
        %2102 = vmatpush.msra.mxu0 0.0
        %2103 = vmatpush.msra.mxu0 0.0
        %2104 = vmatpush.msra.mxu0 0.0
        %2105 = vmatpush.msra.mxu0 0.0
        %2106 = vmatpush.msra.mxu0 0.0
        %2107 = vmatpush.msra.mxu0 0.0
        %2108 = vmatpush.msra.mxu0 0.0
        %2109 = vmatpush.msra.mxu0 %v2076
        %2110 = vmatpush.msra.mxu0 %v2064
        %2111 = vmatpush.msra.mxu0 %v2062
        %2112 = vmatpush.msra.mxu0 %v2060
        %2113 = vmatpush.msra.mxu0 %v2058
        %2114 = vmatmul.f32.gmra.mxu0 %v2069
        %v2115 = vpop.f32.mrf.mxu0
        %v2116 = vadd.f32 0.0, %v2115
        %2117 = vdwg.mxu0
        %2118 = vst [vmem:[%s136] sm:$0xff] %v2096
        %2119 = vst [vmem:[%s136 + $0x8] sm:$0xff] %v2116
        %s2120 = sand.u32 %s71, 1
        %s2121 = scalar_lea.sflag [#allocation4], %s2120
        %s2122 = sand.u32 %s71, 1
        %s2123 = smul.addr %s2122, 16
        %s2124 = scalar_lea.vmem [#allocation3], %s2123
        // Predicated region
        $region29: #{tpu_custom_call.1} parent=27 // pred_check
          %p2125 = pneg %p81
        $region30: #{tpu_custom_call.1} parent=27 // pred_check_branch
          %2127 = sbr.rel (%p2125) target = $region32
        $region31: #{tpu_custom_call.1} parent=27 // pred_region
          %2129 = vsyncadd %s2121, 0
          %s2130 = smul.addr %s16, 2
          %s2131 = smul.addr %s2130, 8
          %s2132 = scalar_lea.hbm %s2, %s2131
          %s2134 = sshll.u32 %s2124, 4
          %s2135 = int_to_ptr.vmem [resolvable:$true] %s2134
          %s2136 = sshll.u32 %s2132, 4
          %s2137 = int_to_ptr.hbm [resolvable:$true] %s2136
          %2139 = dma.vmem_to_hbm [thread:$0]  %s2135, 256, %s2137, %s2121
        $region32: #{tpu_custom_call.1} parent=27 // pred_fallthru
          _
      $region28: #{tpu_custom_call.1} parent=5 // pred_fallthru
        _
      %p2140 = scmp.le.s32.totalorder 2, %s11
      // Predicated region
      $region33: #{tpu_custom_call.1} parent=5 // pred_check
        %p2141 = pneg %p2140
      $region34: #{tpu_custom_call.1} parent=5 // pred_check_branch
        %2143 = sbr.rel (%p2141) target = $region36
      $region35: #{tpu_custom_call.1} parent=5 // pred_region
        %s2144 = ssub.s32 %s11, 2
        // Predicated region
        $region37: #{tpu_custom_call.1} parent=35 // pred_check
          %p2145 = pneg %p87
        $region38: #{tpu_custom_call.1} parent=35 // pred_check_branch
          %2147 = sbr.rel (%p2145) target = $region40
        $region39: #{tpu_custom_call.1} parent=35 // pred_region
          %s2148 = sand.u32 %s72, 1
          %s2149 = scalar_lea.sflag [#allocation4], %s2148
          %s2150 = sand.u32 %s72, 1
          %s2151 = smul.addr %s2150, 16
          %s2152 = scalar_lea.vmem [#allocation3], %s2151
          %2154 = dma.done %s2149, 256
        $region40: #{tpu_custom_call.1} parent=35 // pred_fallthru
          _
      $region36: #{tpu_custom_call.1} parent=5 // pred_fallthru
        _
    $region6: #{tpu_custom_call.1} parent=1 // loop_footer
      %s15 = sadd.s32 1, %s11
    $region7: #{tpu_custom_call.1} parent=1 // loop_footer_branch
      %10 = sbr.rel target = $region3
    $region8: #{tpu_custom_call.1} parent=1 // loop_exit
      _
    %2155 = vsyncpa [#allocation4], 1
    %s2156 = scalar_lea.sflag [#allocation4], 1
    %2157 = vsyncpa %s2156, 1

</llo_original>
